<compile_context>
chip_gen: v5e
topology: v5e:2x2
jax: 0.10.0
libtpu: 0.0.40
codegen_flags: <defaults>
</compile_context>

<pallas_src>
import functools

import jax
import jax.numpy as jnp
import numpy as np
from jax.experimental import pallas as pl
from jax.experimental.pallas import tpu as pltpu

NUM_CLASSES = 15
BG_LABEL = 15


def _round_up(x, m):
    return ((x + m - 1) // m) * m


def _pow(x, g):
    # g is a static Python float
    if g == 2.0:
        return x * x
    # TODO(synk): for non-default gamma this gives ~1e-30**g instead of 0 at x==0.
    return jnp.exp(g * jnp.log(jnp.maximum(x, 1e-30)))


def _default_nsplit():
    # 2 TensorCores per chip only on v7x; on single-TC v5e/v6e an extra
    # "parallel" split only duplicates init/finalize work.
    try:
        kind = jax.devices()[0].device_kind.lower()
    except Exception:
        return 1
    return 2 if ("v7" in kind or "7x" in kind) else 1


def _objectness_loss_kernel(cls_ref, obj_ref, tgt_ref, out_ref,
                            focal_acc, bce_acc, fg_acc, *,
                            gamma, alpha, cls_sample_major):
    """Lane-dense (C, TN) compute; the 128-wide lane axis carries samples.

    Per step: ~16 VALU ops per (C,TN) element (select-based focal algebra),
    3 EUP transcendentals, one XLU class-reduce.  Accumulation is lane-wise
    into (1, TN) VMEM rows, reduced to scalars once at the last step of each
    split and stored in that split's (1, 8, 128) output block:
      sublane 0 -> sum BCE(obj, fg), 1 -> sum focal (fg rows), 2 -> fg count.
    """
    i = pl.program_id(1)

    @pl.when(i == 0)
    def _init():
        focal_acc[...] = jnp.zeros_like(focal_acc)
        bce_acc[...] = jnp.zeros_like(bce_acc)
        fg_acc[...] = jnp.zeros_like(fg_acc)

    if cls_sample_major:
        # (TN, C) row tile straight from the (N, C) HBM array; transpose on the
        # (idle) XLU instead of paying an extra HBM pass in the wrapper.
        cls = jnp.transpose(cls_ref[...].astype(jnp.float32))      # (C, TN)
    else:
        cls = cls_ref[...].astype(jnp.float32)                     # (C, TN)
    obj = obj_ref[...].astype(jnp.float32)                         # (1, TN) probs
    tgt = tgt_ref[...]                                             # (1, TN) int32

    fg_b = tgt != BG_LABEL                                         # (1, TN) bool
    fg = fg_b.astype(jnp.float32)

    # --- objectness BCE (target = fg mask): single log + select.
    # Padded columns (obj=0, tgt=BG) give log(1 - 0) = 0 -> contribute exactly 0.
    bce = -jnp.maximum(jnp.log(jnp.where(fg_b, obj, 1.0 - obj)), -100.0)

    # --- sigmoid focal loss on fg_pred = cls_pred * obj_pred (ver=1).
    # x is masked with fg BEFORE the exp/log chain so garbage lanes of an
    # overhanging cls tile never reach the transcendentals / accumulators
    # (background columns are zero-gated by fg anyway).
    x = jnp.where(fg_b, cls * obj, 0.0)                            # (C, TN)
    z = jnp.log(1.0 + jnp.exp(-jnp.abs(x)))
    lsp = jnp.minimum(x, 0.0) - z                                  # log sigmoid(x)
    p = jnp.exp(lsp)                                               # sigmoid(x)
    is_t = jax.lax.broadcasted_iota(jnp.int32, x.shape, 0) == tgt  # one-hot mask
    one_minus_pt = jnp.where(is_t, 1.0 - p, p)                     # 1 - pt
    ce = jnp.where(is_t, 0.0, x) - lsp                             # -(t*lsp+(1-t)*lsn)
    aw = jnp.where(is_t, alpha, 1.0 - alpha) * fg                  # alpha bal * fg gate
    focal = aw * _pow(one_minus_pt, gamma) * ce                    # (C, TN)

    # Class-axis reduce on the XLU before accumulating: keeps the accumulator a
    # single (1, TN) row and frees VALU / the store slot.
    focal_acc[...] += jnp.sum(focal, axis=0, keepdims=True)
    bce_acc[...] += bce
    fg_acc[...] += fg

    @pl.when(i == pl.num_programs(1) - 1)
    def _final():
        bce_total = jnp.sum(bce_acc[...])
        focal_total = jnp.sum(focal_acc[...])
        fg_total = jnp.sum(fg_acc[...])
        row = jax.lax.broadcasted_iota(jnp.int32, out_ref.shape, 1)
        out_ref[...] = (jnp.where(row == 0, bce_total, 0.0)
                        + jnp.where(row == 1, focal_total, 0.0)
                        + jnp.where(row == 2, fg_total, 0.0))


def objectness_loss3(cls_pred, obj_pred, target, *, loss_weight=1.0,
                     obj_loss_weight=1.0, gamma=2.0, alpha=0.25,
                     tn=8192, nsplit=None):
    """Pallas implementation of ObjectnessLoss3.forward (reduction='mean').

    cls_pred: (N, C) logits (f32 or bf16 -- cast happens inside the kernel),
    obj_pred: (N, 1) or (N,) probabilities in [0, 1], target: (N,) int labels
    in [0, 15] (15 == background).
    """
    n, c = cls_pred.shape
    if nsplit is None:
        nsplit = _default_nsplit()
    lane = 128
    tn = max(lane, (tn // lane) * lane)
    # Shrink the tile for small N so we do not over-pad / over-split.
    tn_eff = min(tn, _round_up(-(-n // max(nsplit, 1)), lane))
    total_blocks = -(-n // tn_eff)                 # blocks needed to cover N
    nsplit = max(1, min(nsplit, total_blocks))
    n_inner = -(-total_blocks // nsplit)           # blocks per split (ceil)
    n_pad = nsplit * n_inner * tn_eff
    max_blk = total_blocks - 1

    # Only the cheap per-sample rows are padded (obj=0, tgt=BG -> contribute 0);
    # the dominant (N, C) cls array is fed to the kernel untouched.
    obj2d = jnp.pad(obj_pred.reshape(-1).astype(jnp.float32),
                    (0, n_pad - n)).reshape(1, n_pad)
    tgt2d = jnp.pad(target.reshape(-1).astype(jnp.int32),
                    (0, n_pad - n), constant_values=BG_LABEL).reshape(1, n_pad)

    row_spec = pl.BlockSpec((1, tn_eff), lambda s, i: (0, s * n_inner + i))

    def run(sample_major):
        kernel = functools.partial(_objectness_loss_kernel, gamma=gamma,
                                   alpha=alpha, cls_sample_major=sample_major)
        if sample_major:
            cls_in = cls_pred                                        # (N, C) as-is
            # Clamp so a (possibly duplicated) trailing block never starts past
            # the end of cls; its contribution is zeroed via the padded tgt.
            cls_spec = pl.BlockSpec(
                (tn_eff, c),
                lambda s, i: (jnp.minimum(s * n_inner + i, max_blk), 0))
        else:
            cls_in = jnp.pad(cls_pred.T.astype(jnp.float32),
                             ((0, 0), (0, n_pad - n)))               # (C, n_pad)
            cls_spec = pl.BlockSpec((c, tn_eff), lambda s, i: (0, s * n_inner + i))
        return pl.pallas_call(
            kernel,
            out_shape=jax.ShapeDtypeStruct((nsplit, 8, 128), jnp.float32),
            grid_spec=pltpu.PrefetchScalarGridSpec(
                num_scalar_prefetch=0,
                grid=(nsplit, n_inner),
                in_specs=[cls_spec, row_spec, row_spec],
                out_specs=pl.BlockSpec((1, 8, 128), lambda s, i: (s, 0, 0)),
                scratch_shapes=[
                    pltpu.VMEM((1, tn_eff), jnp.float32),   # focal row sums
                    pltpu.VMEM((1, tn_eff), jnp.float32),   # bce row sums
                    pltpu.VMEM((1, tn_eff), jnp.float32),   # fg-count row sums
                ],
            ),
            compiler_params=pltpu.CompilerParams(
                dimension_semantics=("parallel", "arbitrary")),
        )(cls_in, obj2d, tgt2d)

    try:
        # Preferred: consume cls in its natural (N, C) layout, transpose in-kernel.
        part = run(sample_major=True)
    except Exception:
        # TODO(synk): fallback pays one extra HBM transpose+pad pass over cls;
        # only taken if the in-kernel (TN, C)->(C, TN) transpose fails to lower.
        part = run(sample_major=False)

    bce_sum = jnp.sum(part[:, 0, 0])
    focal_sum = jnp.sum(part[:, 1, 0])
    fg_cnt = jnp.sum(part[:, 2, 0])

    loss_obj = obj_loss_weight * bce_sum / n
    loss_cls = jnp.where(
        fg_cnt > 0,
        loss_weight * focal_sum / jnp.maximum(fg_cnt * c, 1.0),
        0.0,
    )
    return loss_cls + loss_obj


def objectness_loss3_ref(cls_pred, obj_pred, target, *, loss_weight=1.0,
                         obj_loss_weight=1.0, gamma=2.0, alpha=0.25):
    """Plain-JAX reference mirroring the PyTorch module (reduction='mean')."""
    n, c = cls_pred.shape
    fg = (target != BG_LABEL)
    p = obj_pred.reshape(-1)
    t = fg.astype(jnp.float32)
    bce = -(t * jnp.maximum(jnp.log(p), -100.0)
            + (1.0 - t) * jnp.maximum(jnp.log(1.0 - p), -100.0))
    loss_obj = obj_loss_weight * jnp.mean(bce)

    x = cls_pred.astype(jnp.float32) * obj_pred.reshape(n, 1)
    pr = jax.nn.sigmoid(x)
    onehot = jax.nn.one_hot(target, c, dtype=jnp.float32)
    fl = (alpha * onehot * (1.0 - pr) ** gamma * (-jax.nn.log_sigmoid(x))
          + (1.0 - alpha) * (1.0 - onehot) * pr ** gamma * (-jax.nn.log_sigmoid(-x)))
    fl = fl * t[:, None]
    nfg = jnp.sum(t)
    loss_cls = jnp.where(nfg > 0,
                         loss_weight * jnp.sum(fl) / jnp.maximum(nfg * c, 1.0),
                         0.0)
    return loss_cls + loss_obj


if __name__ == "__main__":
    key = jax.random.PRNGKey(0)
    k1, k2, k3 = jax.random.split(key, 3)

    # N deliberately not a multiple of 128 to exercise the masked tail block.
    N, C = 300, NUM_CLASSES
    cls_pred = jax.random.normal(k1, (N, C), dtype=jnp.float32)
    obj_pred = jax.nn.sigmoid(jax.random.normal(k2, (N, 1), dtype=jnp.float32))
    target = jax.random.randint(k3, (N,), 0, NUM_CLASSES + 1, dtype=jnp.int32)

    ref = objectness_loss3_ref(cls_pred, obj_pred, target)

    # Default configuration (auto nsplit, large tile).
    loss = jax.block_until_ready(objectness_loss3(cls_pred, obj_pred, target))
    np.testing.assert_allclose(np.asarray(loss), np.asarray(ref),
                               rtol=1e-4, atol=1e-5)

    # Small tile + forced 2-way split: exercises multi-step accumulation, the
    # clamped duplicate trailing block, and the in-kernel tail masking.
    loss2 = jax.block_until_ready(
        objectness_loss3(cls_pred, obj_pred, target, tn=128, nsplit=2))
    np.testing.assert_allclose(np.asarray(loss2), np.asarray(ref),
                               rtol=1e-4, atol=1e-5)

    print("KERNEL_OK")
</pallas_src>

<mosaic_0001>
module attributes {stable_mosaic.version = 11 : i64} {
  func.func @_objectness_loss_kernel(%arg0: i32, %arg1: i32, %arg2: memref<384x15xf32, #tpu.memory_space<vmem>>, %arg3: memref<1x384xf32, #tpu.memory_space<vmem>>, %arg4: memref<1x384xi32, #tpu.memory_space<vmem>>, %arg5: memref<1x8x128xf32, #tpu.memory_space<vmem>>, %arg6: memref<1x384xf32, #tpu.memory_space<vmem>>, %arg7: memref<1x384xf32, #tpu.memory_space<vmem>>, %arg8: memref<1x384xf32, #tpu.memory_space<vmem>>) attributes {dimension_semantics = [#tpu.dimension_semantics<parallel>, #tpu.dimension_semantics<arbitrary>], iteration_bounds = array<i64: 1, 1>, scalar_prefetch = 0 : i64, scratch_operands = 3 : i64, tpu.core_type = #tpu.core_type<tc>, window_params = [{transform_indices = @transform_0, window_bounds = array<i64: 384, 15>}, {transform_indices = @transform_1, window_bounds = array<i64: 1, 384>}, {transform_indices = @transform_2, window_bounds = array<i64: 1, 384>}, {transform_indices = @transform_3, window_bounds = array<i64: 1, 8, 128>}]} {
    %c0_i32 = arith.constant 0 : i32
    %0 = arith.cmpi eq, %arg1, %c0_i32 : i32
    %1 = arith.extui %0 : i1 to i32
    %c0_i32_0 = arith.constant 0 : i32
    %2 = arith.cmpi ne, %1, %c0_i32_0 : i32
    scf.if %2 {
      %cst_31 = arith.constant 0.000000e+00 : f32
      %67 = vector.broadcast %cst_31 : f32 to vector<1x384xf32>
      %c0_32 = arith.constant 0 : index
      %c0_33 = arith.constant 0 : index
      %68 = vector.load %arg6[%c0_32, %c0_33] : memref<1x384xf32, #tpu.memory_space<vmem>>, vector<1x384xf32>
      tpu.vector_store %arg6[%c0_32, %c0_33], %67 {strides = array<i32>} : memref<1x384xf32, #tpu.memory_space<vmem>>, vector<1x384xf32>,
      %cst_34 = arith.constant 0.000000e+00 : f32
      %69 = vector.broadcast %cst_34 : f32 to vector<1x384xf32>
      %c0_35 = arith.constant 0 : index
      %c0_36 = arith.constant 0 : index
      %70 = vector.load %arg7[%c0_35, %c0_36] : memref<1x384xf32, #tpu.memory_space<vmem>>, vector<1x384xf32>
      tpu.vector_store %arg7[%c0_35, %c0_36], %69 {strides = array<i32>} : memref<1x384xf32, #tpu.memory_space<vmem>>, vector<1x384xf32>,
      %cst_37 = arith.constant 0.000000e+00 : f32
      %71 = vector.broadcast %cst_37 : f32 to vector<1x384xf32>
      %c0_38 = arith.constant 0 : index
      %c0_39 = arith.constant 0 : index
      %72 = vector.load %arg8[%c0_38, %c0_39] : memref<1x384xf32, #tpu.memory_space<vmem>>, vector<1x384xf32>
      tpu.vector_store %arg8[%c0_38, %c0_39], %71 {strides = array<i32>} : memref<1x384xf32, #tpu.memory_space<vmem>>, vector<1x384xf32>,
    } else {
    }
    %c0 = arith.constant 0 : index
    %c0_1 = arith.constant 0 : index
    %3 = vector.load %arg2[%c0, %c0_1] : memref<384x15xf32, #tpu.memory_space<vmem>>, vector<384x15xf32>
    %4 = tpu.transpose %3, [1, 0] : vector<384x15xf32> -> vector<15x384xf32>
    %c0_2 = arith.constant 0 : index
    %c0_3 = arith.constant 0 : index
    %5 = vector.load %arg3[%c0_2, %c0_3] : memref<1x384xf32, #tpu.memory_space<vmem>>, vector<1x384xf32>
    %c0_4 = arith.constant 0 : index
    %c0_5 = arith.constant 0 : index
    %6 = vector.load %arg4[%c0_4, %c0_5] : memref<1x384xi32, #tpu.memory_space<vmem>>, vector<1x384xi32>
    %c15_i32 = arith.constant 15 : i32
    %7 = vector.broadcast %c15_i32 : i32 to vector<1x384xi32>
    %8 = arith.cmpi ne, %6, %7 : vector<1x384xi32>
    %9 = arith.extui %8 : vector<1x384xi1> to vector<1x384xi32>
    %10 = arith.sitofp %9 : vector<1x384xi32> to vector<1x384xf32>
    %cst = arith.constant 1.000000e+00 : f32
    %11 = vector.broadcast %cst : f32 to vector<1x384xf32>
    %12 = arith.subf %11, %5 : vector<1x384xf32>
    %13 = arith.select %8, %5, %12 : vector<1x384xi1>, vector<1x384xf32>
    %14 = math.log %13 : vector<1x384xf32>
    %cst_6 = arith.constant -1.000000e+02 : f32
    %15 = vector.broadcast %cst_6 : f32 to vector<1x384xf32>
    %16 = arith.maximumf %14, %15 : vector<1x384xf32>
    %cst_7 = arith.constant 0.000000e+00 : f32
    %17 = vector.broadcast %cst_7 : f32 to vector<1x384xf32>
    %18 = arith.subf %17, %16 : vector<1x384xf32>
    %19 = vector.broadcast %5 : vector<1x384xf32> to vector<15x384xf32>
    %20 = arith.mulf %4, %19 : vector<15x384xf32>
    %cst_8 = arith.constant 0.000000e+00 : f32
    %21 = vector.shape_cast %8 : vector<1x384xi1> to vector<1x384xi1>
    %22 = vector.broadcast %21 : vector<1x384xi1> to vector<15x384xi1>
    %23 = vector.broadcast %cst_8 : f32 to vector<15x384xf32>
    %24 = arith.select %22, %20, %23 : vector<15x384xi1>, vector<15x384xf32>
    %25 = math.absf %24 : vector<15x384xf32>
    %cst_9 = arith.constant 0.000000e+00 : f32
    %26 = vector.broadcast %cst_9 : f32 to vector<15x384xf32>
    %27 = arith.subf %26, %25 : vector<15x384xf32>
    %28 = math.exp %27 : vector<15x384xf32>
    %cst_10 = arith.constant 1.000000e+00 : f32
    %29 = vector.broadcast %cst_10 : f32 to vector<15x384xf32>
    %30 = arith.addf %29, %28 : vector<15x384xf32>
    %31 = math.log %30 : vector<15x384xf32>
    %cst_11 = arith.constant 0.000000e+00 : f32
    %32 = vector.broadcast %cst_11 : f32 to vector<15x384xf32>
    %33 = arith.minimumf %24, %32 : vector<15x384xf32>
    %34 = arith.subf %33, %31 : vector<15x384xf32>
    %35 = math.exp %34 : vector<15x384xf32>
    %36 = tpu.iota {dimensions = array<i32: 0>} : vector<15x384xi32>
    %37 = vector.broadcast %6 : vector<1x384xi32> to vector<15x384xi32>
    %38 = arith.cmpi eq, %36, %37 : vector<15x384xi32>
    %cst_12 = arith.constant 1.000000e+00 : f32
    %39 = vector.broadcast %cst_12 : f32 to vector<15x384xf32>
    %40 = arith.subf %39, %35 : vector<15x384xf32>
    %41 = arith.select %38, %40, %35 : vector<15x384xi1>, vector<15x384xf32>
    %cst_13 = arith.constant 0.000000e+00 : f32
    %42 = vector.broadcast %cst_13 : f32 to vector<15x384xf32>
    %43 = arith.select %38, %42, %24 : vector<15x384xi1>, vector<15x384xf32>
    %44 = arith.subf %43, %34 : vector<15x384xf32>
    %cst_14 = arith.constant 2.500000e-01 : f32
    %cst_15 = arith.constant 7.500000e-01 : f32
    %45 = vector.broadcast %cst_14 : f32 to vector<15x384xf32>
    %46 = vector.broadcast %cst_15 : f32 to vector<15x384xf32>
    %47 = arith.select %38, %45, %46 : vector<15x384xi1>, vector<15x384xf32>
    %48 = vector.broadcast %10 : vector<1x384xf32> to vector<15x384xf32>
    %49 = arith.mulf %47, %48 : vector<15x384xf32>
    %50 = arith.mulf %41, %41 : vector<15x384xf32>
    %51 = arith.mulf %49, %50 : vector<15x384xf32>
    %52 = arith.mulf %51, %44 : vector<15x384xf32>
    %c0_16 = arith.constant 0 : index
    %c0_17 = arith.constant 0 : index
    %53 = vector.load %arg6[%c0_16, %c0_17] : memref<1x384xf32, #tpu.memory_space<vmem>>, vector<1x384xf32>
    %cst_18 = arith.constant dense<0.000000e+00> : vector<384xf32>
    %54 = vector.multi_reduction <add>, %52, %cst_18 [0] : vector<15x384xf32> to vector<384xf32>
    %55 = vector.shape_cast %54 : vector<384xf32> to vector<1x384xf32>
    %56 = arith.addf %53, %55 : vector<1x384xf32>
    %c0_19 = arith.constant 0 : index
    %c0_20 = arith.constant 0 : index
    %57 = vector.load %arg6[%c0_19, %c0_20] : memref<1x384xf32, #tpu.memory_space<vmem>>, vector<1x384xf32>
    tpu.vector_store %arg6[%c0_19, %c0_20], %56 {strides = array<i32>} : memref<1x384xf32, #tpu.memory_space<vmem>>, vector<1x384xf32>,
    %c0_21 = arith.constant 0 : index
    %c0_22 = arith.constant 0 : index
    %58 = vector.load %arg7[%c0_21, %c0_22] : memref<1x384xf32, #tpu.memory_space<vmem>>, vector<1x384xf32>
    %59 = arith.addf %58, %18 : vector<1x384xf32>
    %c0_23 = arith.constant 0 : index
    %c0_24 = arith.constant 0 : index
    %60 = vector.load %arg7[%c0_23, %c0_24] : memref<1x384xf32, #tpu.memory_space<vmem>>, vector<1x384xf32>
    tpu.vector_store %arg7[%c0_23, %c0_24], %59 {strides = array<i32>} : memref<1x384xf32, #tpu.memory_space<vmem>>, vector<1x384xf32>,
    %c0_25 = arith.constant 0 : index
    %c0_26 = arith.constant 0 : index
    %61 = vector.load %arg8[%c0_25, %c0_26] : memref<1x384xf32, #tpu.memory_space<vmem>>, vector<1x384xf32>
    %62 = arith.addf %61, %10 : vector<1x384xf32>
    %c0_27 = arith.constant 0 : index
    %c0_28 = arith.constant 0 : index
    %63 = vector.load %arg8[%c0_27, %c0_28] : memref<1x384xf32, #tpu.memory_space<vmem>>, vector<1x384xf32>
    tpu.vector_store %arg8[%c0_27, %c0_28], %62 {strides = array<i32>} : memref<1x384xf32, #tpu.memory_space<vmem>>, vector<1x384xf32>,
    %c0_i32_29 = arith.constant 0 : i32
    %64 = arith.cmpi eq, %arg1, %c0_i32_29 : i32
    %65 = arith.extui %64 : i1 to i32
    %c0_i32_30 = arith.constant 0 : i32
    %66 = arith.cmpi ne, %65, %c0_i32_30 : i32
    scf.if %66 {
      %c0_31 = arith.constant 0 : index
      %c0_32 = arith.constant 0 : index
      %67 = vector.load %arg7[%c0_31, %c0_32] : memref<1x384xf32, #tpu.memory_space<vmem>>, vector<1x384xf32>
      %68 = vector.shape_cast %67 : vector<1x384xf32> to vector<1x1x384xf32>
      %cst_33 = arith.constant dense<0.000000e+00> : vector<1xf32>
      %69 = vector.multi_reduction <add>, %68, %cst_33 [1, 2] : vector<1x1x384xf32> to vector<1xf32>
      %70 = vector.shape_cast %69 : vector<1xf32> to vector<1x1x1xf32>
      %71 = vector.extract %70[0, 0, 0] : f32 from vector<1x1x1xf32>
      %c0_34 = arith.constant 0 : index
      %c0_35 = arith.constant 0 : index
      %72 = vector.load %arg6[%c0_34, %c0_35] : memref<1x384xf32, #tpu.memory_space<vmem>>, vector<1x384xf32>
      %73 = vector.shape_cast %72 : vector<1x384xf32> to vector<1x1x384xf32>
      %cst_36 = arith.constant dense<0.000000e+00> : vector<1xf32>
      %74 = vector.multi_reduction <add>, %73, %cst_36 [1, 2] : vector<1x1x384xf32> to vector<1xf32>
      %75 = vector.shape_cast %74 : vector<1xf32> to vector<1x1x1xf32>
      %76 = vector.extract %75[0, 0, 0] : f32 from vector<1x1x1xf32>
      %c0_37 = arith.constant 0 : index
      %c0_38 = arith.constant 0 : index
      %77 = vector.load %arg8[%c0_37, %c0_38] : memref<1x384xf32, #tpu.memory_space<vmem>>, vector<1x384xf32>
      %78 = vector.shape_cast %77 : vector<1x384xf32> to vector<1x1x384xf32>
      %cst_39 = arith.constant dense<0.000000e+00> : vector<1xf32>
      %79 = vector.multi_reduction <add>, %78, %cst_39 [1, 2] : vector<1x1x384xf32> to vector<1xf32>
      %80 = vector.shape_cast %79 : vector<1xf32> to vector<1x1x1xf32>
      %81 = vector.extract %80[0, 0, 0] : f32 from vector<1x1x1xf32>
      %82 = tpu.iota {dimensions = array<i32: 1>} : vector<1x8x128xi32>
      %c0_i32_40 = arith.constant 0 : i32
      %83 = vector.broadcast %c0_i32_40 : i32 to vector<1x8x128xi32>
      %84 = arith.cmpi eq, %82, %83 : vector<1x8x128xi32>
      %cst_41 = arith.constant 0.000000e+00 : f32
      %85 = vector.broadcast %71 : f32 to vector<1x8x128xf32>
      %86 = vector.broadcast %cst_41 : f32 to vector<1x8x128xf32>
      %87 = arith.select %84, %85, %86 : vector<1x8x128xi1>, vector<1x8x128xf32>
      %c1_i32 = arith.constant 1 : i32
      %88 = vector.broadcast %c1_i32 : i32 to vector<1x8x128xi32>
      %89 = arith.cmpi eq, %82, %88 : vector<1x8x128xi32>
      %cst_42 = arith.constant 0.000000e+00 : f32
      %90 = vector.broadcast %76 : f32 to vector<1x8x128xf32>
      %91 = vector.broadcast %cst_42 : f32 to vector<1x8x128xf32>
      %92 = arith.select %89, %90, %91 : vector<1x8x128xi1>, vector<1x8x128xf32>
      %93 = arith.addf %87, %92 : vector<1x8x128xf32>
      %c2_i32 = arith.constant 2 : i32
      %94 = vector.broadcast %c2_i32 : i32 to vector<1x8x128xi32>
      %95 = arith.cmpi eq, %82, %94 : vector<1x8x128xi32>
      %cst_43 = arith.constant 0.000000e+00 : f32
      %96 = vector.broadcast %81 : f32 to vector<1x8x128xf32>
      %97 = vector.broadcast %cst_43 : f32 to vector<1x8x128xf32>
      %98 = arith.select %95, %96, %97 : vector<1x8x128xi1>, vector<1x8x128xf32>
      %99 = arith.addf %93, %98 : vector<1x8x128xf32>
      %c0_44 = arith.constant 0 : index
      %c0_45 = arith.constant 0 : index
      %c0_46 = arith.constant 0 : index
      %100 = vector.load %arg5[%c0_44, %c0_45, %c0_46] : memref<1x8x128xf32, #tpu.memory_space<vmem>>, vector<1x8x128xf32>
      tpu.vector_store %arg5[%c0_44, %c0_45, %c0_46], %99 {strides = array<i32>} : memref<1x8x128xf32, #tpu.memory_space<vmem>>, vector<1x8x128xf32>,
    } else {
    }
    return
  }
  func.func @transform_0(%arg0: i32, %arg1: i32) -> (i32, i32) {
    %c1_i32 = arith.constant 1 : i32
    %0 = arith.muli %arg0, %c1_i32 : i32
    %1 = arith.addi %0, %arg1 : i32
    %c0_i32 = arith.constant 0 : i32
    %2 = arith.minsi %1, %c0_i32 : i32
    %c0_i32_0 = arith.constant 0 : i32
    %c0_i32_1 = arith.constant 0 : i32
    return %2, %c0_i32_0 : i32, i32
  }
  func.func @transform_1(%arg0: i32, %arg1: i32) -> (i32, i32) {
    %c1_i32 = arith.constant 1 : i32
    %0 = arith.muli %arg0, %c1_i32 : i32
    %1 = arith.addi %0, %arg1 : i32
    %c0_i32 = arith.constant 0 : i32
    %c0_i32_0 = arith.constant 0 : i32
    return %c0_i32, %1 : i32, i32
  }
  func.func @transform_2(%arg0: i32, %arg1: i32) -> (i32, i32) {
    %c1_i32 = arith.constant 1 : i32
    %0 = arith.muli %arg0, %c1_i32 : i32
    %1 = arith.addi %0, %arg1 : i32
    %c0_i32 = arith.constant 0 : i32
    %c0_i32_0 = arith.constant 0 : i32
    return %c0_i32, %1 : i32, i32
  }
  func.func @transform_3(%arg0: i32, %arg1: i32) -> (i32, i32, i32) {
    %c0_i32 = arith.constant 0 : i32
    %c0_i32_0 = arith.constant 0 : i32
    %c0_i32_1 = arith.constant 0 : i32
    return %arg0, %c0_i32, %c0_i32_0 : i32, i32, i32
  }
}

module attributes {stable_mosaic.version = 11 : i64} {
  func.func @_objectness_loss_kernel(%arg0: i32, %arg1: i32, %arg2: memref<15x384xf32, #tpu.memory_space<vmem>>, %arg3: memref<1x384xf32, #tpu.memory_space<vmem>>, %arg4: memref<1x384xi32, #tpu.memory_space<vmem>>, %arg5: memref<1x8x128xf32, #tpu.memory_space<vmem>>, %arg6: memref<1x384xf32, #tpu.memory_space<vmem>>, %arg7: memref<1x384xf32, #tpu.memory_space<vmem>>, %arg8: memref<1x384xf32, #tpu.memory_space<vmem>>) attributes {dimension_semantics = [#tpu.dimension_semantics<parallel>, #tpu.dimension_semantics<arbitrary>], iteration_bounds = array<i64: 1, 1>, scalar_prefetch = 0 : i64, scratch_operands = 3 : i64, tpu.core_type = #tpu.core_type<tc>, window_params = [{transform_indices = @transform_0, window_bounds = array<i64: 15, 384>}, {transform_indices = @transform_1, window_bounds = array<i64: 1, 384>}, {transform_indices = @transform_2, window_bounds = array<i64: 1, 384>}, {transform_indices = @transform_3, window_bounds = array<i64: 1, 8, 128>}]} {
    %c0_i32 = arith.constant 0 : i32
    %0 = arith.cmpi eq, %arg1, %c0_i32 : i32
    %1 = arith.extui %0 : i1 to i32
    %c0_i32_0 = arith.constant 0 : i32
    %2 = arith.cmpi ne, %1, %c0_i32_0 : i32
    scf.if %2 {
      %cst_31 = arith.constant 0.000000e+00 : f32
      %66 = vector.broadcast %cst_31 : f32 to vector<1x384xf32>
      %c0_32 = arith.constant 0 : index
      %c0_33 = arith.constant 0 : index
      %67 = vector.load %arg6[%c0_32, %c0_33] : memref<1x384xf32, #tpu.memory_space<vmem>>, vector<1x384xf32>
      tpu.vector_store %arg6[%c0_32, %c0_33], %66 {strides = array<i32>} : memref<1x384xf32, #tpu.memory_space<vmem>>, vector<1x384xf32>,
      %cst_34 = arith.constant 0.000000e+00 : f32
      %68 = vector.broadcast %cst_34 : f32 to vector<1x384xf32>
      %c0_35 = arith.constant 0 : index
      %c0_36 = arith.constant 0 : index
      %69 = vector.load %arg7[%c0_35, %c0_36] : memref<1x384xf32, #tpu.memory_space<vmem>>, vector<1x384xf32>
      tpu.vector_store %arg7[%c0_35, %c0_36], %68 {strides = array<i32>} : memref<1x384xf32, #tpu.memory_space<vmem>>, vector<1x384xf32>,
      %cst_37 = arith.constant 0.000000e+00 : f32
      %70 = vector.broadcast %cst_37 : f32 to vector<1x384xf32>
      %c0_38 = arith.constant 0 : index
      %c0_39 = arith.constant 0 : index
      %71 = vector.load %arg8[%c0_38, %c0_39] : memref<1x384xf32, #tpu.memory_space<vmem>>, vector<1x384xf32>
      tpu.vector_store %arg8[%c0_38, %c0_39], %70 {strides = array<i32>} : memref<1x384xf32, #tpu.memory_space<vmem>>, vector<1x384xf32>,
    } else {
    }
    %c0 = arith.constant 0 : index
    %c0_1 = arith.constant 0 : index
    %3 = vector.load %arg2[%c0, %c0_1] : memref<15x384xf32, #tpu.memory_space<vmem>>, vector<15x384xf32>
    %c0_2 = arith.constant 0 : index
    %c0_3 = arith.constant 0 : index
    %4 = vector.load %arg3[%c0_2, %c0_3] : memref<1x384xf32, #tpu.memory_space<vmem>>, vector<1x384xf32>
    %c0_4 = arith.constant 0 : index
    %c0_5 = arith.constant 0 : index
    %5 = vector.load %arg4[%c0_4, %c0_5] : memref<1x384xi32, #tpu.memory_space<vmem>>, vector<1x384xi32>
    %c15_i32 = arith.constant 15 : i32
    %6 = vector.broadcast %c15_i32 : i32 to vector<1x384xi32>
    %7 = arith.cmpi ne, %5, %6 : vector<1x384xi32>
    %8 = arith.extui %7 : vector<1x384xi1> to vector<1x384xi32>
    %9 = arith.sitofp %8 : vector<1x384xi32> to vector<1x384xf32>
    %cst = arith.constant 1.000000e+00 : f32
    %10 = vector.broadcast %cst : f32 to vector<1x384xf32>
    %11 = arith.subf %10, %4 : vector<1x384xf32>
    %12 = arith.select %7, %4, %11 : vector<1x384xi1>, vector<1x384xf32>
    %13 = math.log %12 : vector<1x384xf32>
    %cst_6 = arith.constant -1.000000e+02 : f32
    %14 = vector.broadcast %cst_6 : f32 to vector<1x384xf32>
    %15 = arith.maximumf %13, %14 : vector<1x384xf32>
    %cst_7 = arith.constant 0.000000e+00 : f32
    %16 = vector.broadcast %cst_7 : f32 to vector<1x384xf32>
    %17 = arith.subf %16, %15 : vector<1x384xf32>
    %18 = vector.broadcast %4 : vector<1x384xf32> to vector<15x384xf32>
    %19 = arith.mulf %3, %18 : vector<15x384xf32>
    %cst_8 = arith.constant 0.000000e+00 : f32
    %20 = vector.shape_cast %7 : vector<1x384xi1> to vector<1x384xi1>
    %21 = vector.broadcast %20 : vector<1x384xi1> to vector<15x384xi1>
    %22 = vector.broadcast %cst_8 : f32 to vector<15x384xf32>
    %23 = arith.select %21, %19, %22 : vector<15x384xi1>, vector<15x384xf32>
    %24 = math.absf %23 : vector<15x384xf32>
    %cst_9 = arith.constant 0.000000e+00 : f32
    %25 = vector.broadcast %cst_9 : f32 to vector<15x384xf32>
    %26 = arith.subf %25, %24 : vector<15x384xf32>
    %27 = math.exp %26 : vector<15x384xf32>
    %cst_10 = arith.constant 1.000000e+00 : f32
    %28 = vector.broadcast %cst_10 : f32 to vector<15x384xf32>
    %29 = arith.addf %28, %27 : vector<15x384xf32>
    %30 = math.log %29 : vector<15x384xf32>
    %cst_11 = arith.constant 0.000000e+00 : f32
    %31 = vector.broadcast %cst_11 : f32 to vector<15x384xf32>
    %32 = arith.minimumf %23, %31 : vector<15x384xf32>
    %33 = arith.subf %32, %30 : vector<15x384xf32>
    %34 = math.exp %33 : vector<15x384xf32>
    %35 = tpu.iota {dimensions = array<i32: 0>} : vector<15x384xi32>
    %36 = vector.broadcast %5 : vector<1x384xi32> to vector<15x384xi32>
    %37 = arith.cmpi eq, %35, %36 : vector<15x384xi32>
    %cst_12 = arith.constant 1.000000e+00 : f32
    %38 = vector.broadcast %cst_12 : f32 to vector<15x384xf32>
    %39 = arith.subf %38, %34 : vector<15x384xf32>
    %40 = arith.select %37, %39, %34 : vector<15x384xi1>, vector<15x384xf32>
    %cst_13 = arith.constant 0.000000e+00 : f32
    %41 = vector.broadcast %cst_13 : f32 to vector<15x384xf32>
    %42 = arith.select %37, %41, %23 : vector<15x384xi1>, vector<15x384xf32>
    %43 = arith.subf %42, %33 : vector<15x384xf32>
    %cst_14 = arith.constant 2.500000e-01 : f32
    %cst_15 = arith.constant 7.500000e-01 : f32
    %44 = vector.broadcast %cst_14 : f32 to vector<15x384xf32>
    %45 = vector.broadcast %cst_15 : f32 to vector<15x384xf32>
    %46 = arith.select %37, %44, %45 : vector<15x384xi1>, vector<15x384xf32>
    %47 = vector.broadcast %9 : vector<1x384xf32> to vector<15x384xf32>
    %48 = arith.mulf %46, %47 : vector<15x384xf32>
    %49 = arith.mulf %40, %40 : vector<15x384xf32>
    %50 = arith.mulf %48, %49 : vector<15x384xf32>
    %51 = arith.mulf %50, %43 : vector<15x384xf32>
    %c0_16 = arith.constant 0 : index
    %c0_17 = arith.constant 0 : index
    %52 = vector.load %arg6[%c0_16, %c0_17] : memref<1x384xf32, #tpu.memory_space<vmem>>, vector<1x384xf32>
    %cst_18 = arith.constant dense<0.000000e+00> : vector<384xf32>
    %53 = vector.multi_reduction <add>, %51, %cst_18 [0] : vector<15x384xf32> to vector<384xf32>
    %54 = vector.shape_cast %53 : vector<384xf32> to vector<1x384xf32>
    %55 = arith.addf %52, %54 : vector<1x384xf32>
    %c0_19 = arith.constant 0 : index
    %c0_20 = arith.constant 0 : index
    %56 = vector.load %arg6[%c0_19, %c0_20] : memref<1x384xf32, #tpu.memory_space<vmem>>, vector<1x384xf32>
    tpu.vector_store %arg6[%c0_19, %c0_20], %55 {strides = array<i32>} : memref<1x384xf32, #tpu.memory_space<vmem>>, vector<1x384xf32>,
    %c0_21 = arith.constant 0 : index
    %c0_22 = arith.constant 0 : index
    %57 = vector.load %arg7[%c0_21, %c0_22] : memref<1x384xf32, #tpu.memory_space<vmem>>, vector<1x384xf32>
    %58 = arith.addf %57, %17 : vector<1x384xf32>
    %c0_23 = arith.constant 0 : index
    %c0_24 = arith.constant 0 : index
    %59 = vector.load %arg7[%c0_23, %c0_24] : memref<1x384xf32, #tpu.memory_space<vmem>>, vector<1x384xf32>
    tpu.vector_store %arg7[%c0_23, %c0_24], %58 {strides = array<i32>} : memref<1x384xf32, #tpu.memory_space<vmem>>, vector<1x384xf32>,
    %c0_25 = arith.constant 0 : index
    %c0_26 = arith.constant 0 : index
    %60 = vector.load %arg8[%c0_25, %c0_26] : memref<1x384xf32, #tpu.memory_space<vmem>>, vector<1x384xf32>
    %61 = arith.addf %60, %9 : vector<1x384xf32>
    %c0_27 = arith.constant 0 : index
    %c0_28 = arith.constant 0 : index
    %62 = vector.load %arg8[%c0_27, %c0_28] : memref<1x384xf32, #tpu.memory_space<vmem>>, vector<1x384xf32>
    tpu.vector_store %arg8[%c0_27, %c0_28], %61 {strides = array<i32>} : memref<1x384xf32, #tpu.memory_space<vmem>>, vector<1x384xf32>,
    %c0_i32_29 = arith.constant 0 : i32
    %63 = arith.cmpi eq, %arg1, %c0_i32_29 : i32
    %64 = arith.extui %63 : i1 to i32
    %c0_i32_30 = arith.constant 0 : i32
    %65 = arith.cmpi ne, %64, %c0_i32_30 : i32
    scf.if %65 {
      %c0_31 = arith.constant 0 : index
      %c0_32 = arith.constant 0 : index
      %66 = vector.load %arg7[%c0_31, %c0_32] : memref<1x384xf32, #tpu.memory_space<vmem>>, vector<1x384xf32>
      %67 = vector.shape_cast %66 : vector<1x384xf32> to vector<1x1x384xf32>
      %cst_33 = arith.constant dense<0.000000e+00> : vector<1xf32>
      %68 = vector.multi_reduction <add>, %67, %cst_33 [1, 2] : vector<1x1x384xf32> to vector<1xf32>
      %69 = vector.shape_cast %68 : vector<1xf32> to vector<1x1x1xf32>
      %70 = vector.extract %69[0, 0, 0] : f32 from vector<1x1x1xf32>
      %c0_34 = arith.constant 0 : index
      %c0_35 = arith.constant 0 : index
      %71 = vector.load %arg6[%c0_34, %c0_35] : memref<1x384xf32, #tpu.memory_space<vmem>>, vector<1x384xf32>
      %72 = vector.shape_cast %71 : vector<1x384xf32> to vector<1x1x384xf32>
      %cst_36 = arith.constant dense<0.000000e+00> : vector<1xf32>
      %73 = vector.multi_reduction <add>, %72, %cst_36 [1, 2] : vector<1x1x384xf32> to vector<1xf32>
      %74 = vector.shape_cast %73 : vector<1xf32> to vector<1x1x1xf32>
      %75 = vector.extract %74[0, 0, 0] : f32 from vector<1x1x1xf32>
      %c0_37 = arith.constant 0 : index
      %c0_38 = arith.constant 0 : index
      %76 = vector.load %arg8[%c0_37, %c0_38] : memref<1x384xf32, #tpu.memory_space<vmem>>, vector<1x384xf32>
      %77 = vector.shape_cast %76 : vector<1x384xf32> to vector<1x1x384xf32>
      %cst_39 = arith.constant dense<0.000000e+00> : vector<1xf32>
      %78 = vector.multi_reduction <add>, %77, %cst_39 [1, 2] : vector<1x1x384xf32> to vector<1xf32>
      %79 = vector.shape_cast %78 : vector<1xf32> to vector<1x1x1xf32>
      %80 = vector.extract %79[0, 0, 0] : f32 from vector<1x1x1xf32>
      %81 = tpu.iota {dimensions = array<i32: 1>} : vector<1x8x128xi32>
      %c0_i32_40 = arith.constant 0 : i32
      %82 = vector.broadcast %c0_i32_40 : i32 to vector<1x8x128xi32>
      %83 = arith.cmpi eq, %81, %82 : vector<1x8x128xi32>
      %cst_41 = arith.constant 0.000000e+00 : f32
      %84 = vector.broadcast %70 : f32 to vector<1x8x128xf32>
      %85 = vector.broadcast %cst_41 : f32 to vector<1x8x128xf32>
      %86 = arith.select %83, %84, %85 : vector<1x8x128xi1>, vector<1x8x128xf32>
      %c1_i32 = arith.constant 1 : i32
      %87 = vector.broadcast %c1_i32 : i32 to vector<1x8x128xi32>
      %88 = arith.cmpi eq, %81, %87 : vector<1x8x128xi32>
      %cst_42 = arith.constant 0.000000e+00 : f32
      %89 = vector.broadcast %75 : f32 to vector<1x8x128xf32>
      %90 = vector.broadcast %cst_42 : f32 to vector<1x8x128xf32>
      %91 = arith.select %88, %89, %90 : vector<1x8x128xi1>, vector<1x8x128xf32>
      %92 = arith.addf %86, %91 : vector<1x8x128xf32>
      %c2_i32 = arith.constant 2 : i32
      %93 = vector.broadcast %c2_i32 : i32 to vector<1x8x128xi32>
      %94 = arith.cmpi eq, %81, %93 : vector<1x8x128xi32>
      %cst_43 = arith.constant 0.000000e+00 : f32
      %95 = vector.broadcast %80 : f32 to vector<1x8x128xf32>
      %96 = vector.broadcast %cst_43 : f32 to vector<1x8x128xf32>
      %97 = arith.select %94, %95, %96 : vector<1x8x128xi1>, vector<1x8x128xf32>
      %98 = arith.addf %92, %97 : vector<1x8x128xf32>
      %c0_44 = arith.constant 0 : index
      %c0_45 = arith.constant 0 : index
      %c0_46 = arith.constant 0 : index
      %99 = vector.load %arg5[%c0_44, %c0_45, %c0_46] : memref<1x8x128xf32, #tpu.memory_space<vmem>>, vector<1x8x128xf32>
      tpu.vector_store %arg5[%c0_44, %c0_45, %c0_46], %98 {strides = array<i32>} : memref<1x8x128xf32, #tpu.memory_space<vmem>>, vector<1x8x128xf32>,
    } else {
    }
    return
  }
  func.func @transform_0(%arg0: i32, %arg1: i32) -> (i32, i32) {
    %c1_i32 = arith.constant 1 : i32
    %0 = arith.muli %arg0, %c1_i32 : i32
    %1 = arith.addi %0, %arg1 : i32
    %c0_i32 = arith.constant 0 : i32
    %c0_i32_0 = arith.constant 0 : i32
    return %c0_i32, %1 : i32, i32
  }
  func.func @transform_1(%arg0: i32, %arg1: i32) -> (i32, i32) {
    %c1_i32 = arith.constant 1 : i32
    %0 = arith.muli %arg0, %c1_i32 : i32
    %1 = arith.addi %0, %arg1 : i32
    %c0_i32 = arith.constant 0 : i32
    %c0_i32_0 = arith.constant 0 : i32
    return %c0_i32, %1 : i32, i32
  }
  func.func @transform_2(%arg0: i32, %arg1: i32) -> (i32, i32) {
    %c1_i32 = arith.constant 1 : i32
    %0 = arith.muli %arg0, %c1_i32 : i32
    %1 = arith.addi %0, %arg1 : i32
    %c0_i32 = arith.constant 0 : i32
    %c0_i32_0 = arith.constant 0 : i32
    return %c0_i32, %1 : i32, i32
  }
  func.func @transform_3(%arg0: i32, %arg1: i32) -> (i32, i32, i32) {
    %c0_i32 = arith.constant 0 : i32
    %c0_i32_0 = arith.constant 0 : i32
    %c0_i32_1 = arith.constant 0 : i32
    return %arg0, %c0_i32, %c0_i32_0 : i32, i32, i32
  }
}

</mosaic_0001>

<llo_original>
// kernel: tpu_custom_call.1
$region0: #{tpu_custom_call.1}
  #allocation0 [shape = 'u32[]', space=smem, size = 0x4, offset = 0x4, fixed_abs, tag = 'smem constant byte address 0x4 - core index']
  #allocation1 [shape = 'u32[72,128]{1,0:T(1,128)}', space=vmem, size = 0x9000, scoped, tag = 'internal scratch']
  #allocation2 [shape = 'f32[1,384]{1,0:T(1,128)}', space=vmem, size = 0x600, scoped, tag = 'scratch operand']
  #allocation3 [shape = 'f32[1,384]{1,0:T(1,128)}', space=vmem, size = 0x600, scoped, tag = 'scratch operand']
  #allocation4 [shape = 'f32[1,384]{1,0:T(1,128)}', space=vmem, size = 0x600, scoped, tag = 'scratch operand']
  %s0 = inlined_call_operand.vmem [shape: f32[300,15], index: 0, kind: input, shape index: {}]
  %s1 = inlined_call_operand.vmem [shape: f32[1,384], index: 1, kind: input, shape index: {}]
  %s2 = inlined_call_operand.vmem [shape: s32[1,384], index: 2, kind: input, shape index: {}]
  %s3 = inlined_call_operand.hbm [shape: f32[1,8,128], index: 3, kind: output, shape index: {}]
  %s4 = sld [smem:[#allocation0]]
  $region30: #{tpu_custom_call.1} parent=0
    _
  %s6 = ssub.s32 1, %s4
  %s7 = scalar_select 0, %s6, %s4
  $region1: #{tpu_custom_call.1} parent=0
    #allocation5 [shape = 'u8[4096]{0}', space=vmem, size = 0x1000, scoped, tag = 'output window, operand 0, single buffered']
    #allocation6 [shape = 's32[1]{0}', space=sflag, size = 0x4, scoped, tag = 'scoped memory for tpu_custom_call.1']
    %8 = vsyncpa [#allocation6], 0
    // Predicated region
    $region2: #{tpu_custom_call.1} parent=1 // pred_check
      _
    $region3: #{tpu_custom_call.1} parent=1 // pred_check_branch
      %10 = sbr.rel (0) target = $region5
    $region4: #{tpu_custom_call.1} parent=1 // pred_region
      %s11 = sadd.s32 0, 0
      %p12 = scmp.lt.s32.totalorder %s11, 0
      %s13 = scalar_select %p12, %s11, 0
      %s14 = smul.u32 48, %s13
      %s15 = ssub.s32 38, %s14
      %s16 = smul.u32 8, %s15
      %p17 = scmp.lt.s32.totalorder %s14, 37
      %s18 = scalar_select %p17, %s14, 37
      %s19 = smul.addr %s18, 8
      %s20 = scalar_lea.vmem %s0, %s19
      %s21 = sadd.s32 0, 0
      %p22 = scmp.lt.s32.totalorder %s21, 0
      %s23 = scalar_select %p22, %s21, 0
      %s24 = smul.u32 48, %s23
      %s25 = ssub.s32 38, %s24
      %s26 = smul.u32 8, %s25
    $region5: #{tpu_custom_call.1} parent=1 // pred_fallthru
      _
    // Predicated region
    $region6: #{tpu_custom_call.1} parent=1 // pred_check
      _
    $region7: #{tpu_custom_call.1} parent=1 // pred_check_branch
      %28 = sbr.rel (0) target = $region9
    $region8: #{tpu_custom_call.1} parent=1 // pred_region
      %s29 = sadd.s32 0, 0
      %s30 = smul.u32 3, %s29
      %p31 = scmp.lt.s32.totalorder %s30, 2
      %s32 = scalar_select %p31, %s30, 2
      %s33 = scalar_lea.vmem %s1, %s32
      %s34 = sadd.s32 0, 0
      %s35 = smul.u32 3, %s34
    $region9: #{tpu_custom_call.1} parent=1 // pred_fallthru
      _
    // Predicated region
    $region10: #{tpu_custom_call.1} parent=1 // pred_check
      _
    $region11: #{tpu_custom_call.1} parent=1 // pred_check_branch
      %37 = sbr.rel (0) target = $region13
    $region12: #{tpu_custom_call.1} parent=1 // pred_region
      %s38 = sadd.s32 0, 0
      %s39 = smul.u32 3, %s38
      %p40 = scmp.lt.s32.totalorder %s39, 2
      %s41 = scalar_select %p40, %s39, 2
      %s42 = scalar_lea.vmem %s2, %s41
      %s43 = sadd.s32 0, 0
      %s44 = smul.u32 3, %s43
    $region13: #{tpu_custom_call.1} parent=1 // pred_fallthru
      _
    %s45 = sadd.s32 0, 0
    %p46 = scmp.lt.s32.totalorder %s45, 0
    %s47 = scalar_select %p46, %s45, 0
    %s48 = smul.u32 48, %s47
    %s49 = ssub.s32 38, %s48
    %s50 = smul.u32 8, %s49
    %p51 = scmp.lt.s32.totalorder %s48, 37
    %s52 = scalar_select %p51, %s48, 37
    %s53 = smul.addr %s52, 8
    %s54 = scalar_lea.vmem %s0, %s53
    %s55 = sadd.s32 0, 0
    %s56 = smul.u32 3, %s55
    %p57 = scmp.lt.s32.totalorder %s56, 2
    %s58 = scalar_select %p57, %s56, 2
    %s59 = scalar_lea.vmem %s1, %s58
    %s60 = sadd.s32 0, 0
    %s61 = smul.u32 3, %s60
    %p62 = scmp.lt.s32.totalorder %s61, 2
    %s63 = scalar_select %p62, %s61, 2
    %s64 = scalar_lea.vmem %s2, %s63
    %s65 = sadd.s32 0, 0
    %p66 = scmp.lt.s32.totalorder %s65, 0
    %s67 = scalar_select %p66, %s65, 0
    %s68 = smul.u32 48, %s67
    %s69 = ssub.s32 38, %s68
    %s70 = smul.u32 8, %s69
    %p71 = scmp.lt.s32.totalorder %s68, 37
    %s72 = scalar_select %p71, %s68, 37
    %s73 = smul.addr %s72, 8
    %s74 = scalar_lea.vmem %s0, %s73
    %s75 = sadd.s32 0, 0
    %p76 = scmp.lt.s32.totalorder %s75, 0
    %s77 = scalar_select %p76, %s75, 0
    %s78 = smul.u32 48, %s77
    %s79 = ssub.s32 38, %s78
    %s80 = smul.u32 8, %s79
    %s81 = sadd.s32 0, 0
    %s82 = smul.u32 3, %s81
    %p83 = scmp.lt.s32.totalorder %s82, 2
    %s84 = scalar_select %p83, %s82, 2
    %s85 = scalar_lea.vmem %s1, %s84
    %s86 = sadd.s32 0, 0
    %s87 = smul.u32 3, %s86
    %s88 = sadd.s32 0, 0
    %s89 = smul.u32 3, %s88
    %p90 = scmp.lt.s32.totalorder %s89, 2
    %s91 = scalar_select %p90, %s89, 2
    %s92 = scalar_lea.vmem %s2, %s91
    %s93 = sadd.s32 0, 0
    %s94 = smul.u32 3, %s93
    %p95 = scmp.eq.s32.totalorder 0, 0
    // Predicated region
    $region14: #{tpu_custom_call.1} parent=1 // pred_check
      %p96 = pneg %p95
    $region15: #{tpu_custom_call.1} parent=1 // pred_check_branch
      %98 = sbr.rel (%p96) target = $region17
    $region16: #{tpu_custom_call.1} parent=1 // pred_region
      %v99 = vlaneseq
      %vm100 = vcmp.ge.s32.totalorder %v99, 0
      %vm101 = vcmp.lt.s32.totalorder %v99, 384
      %vm102 = vmand %vm100, %vm101
      %103 = vst.msk [vmem:[#allocation2] sm:$0x7] %vm102, 0.0
      %104 = vst.msk [vmem:[#allocation3] sm:$0x7] %vm102, 0.0
      %105 = vst.msk [vmem:[#allocation4] sm:$0x7] %vm102, 0.0
    $region17: #{tpu_custom_call.1} parent=1 // pred_fallthru
      _
    %v106 = vld [vmem:[%s74] sm:$0xff]
    %v107 = vld [vmem:[%s74 + $0x8] sm:$0xff]
    %v108 = vld [vmem:[%s74 + $0x10] sm:$0xff]
    %v109 = vld [vmem:[%s74 + $0x18] sm:$0xff]
    %v110 = vld [vmem:[%s74 + $0x20] sm:$0xff]
    %v111 = vld [vmem:[%s74 + $0x28] sm:$0xff]
    %v112 = vld [vmem:[%s74 + $0x30] sm:$0xff]
    %v113 = vld [vmem:[%s74 + $0x38] sm:$0xff]
    %v114 = vld [vmem:[%s74 + $0x40] sm:$0xff]
    %v115 = vld [vmem:[%s74 + $0x48] sm:$0xff]
    %v116 = vld [vmem:[%s74 + $0x50] sm:$0xff]
    %v117 = vld [vmem:[%s74 + $0x58] sm:$0xff]
    %v118 = vld [vmem:[%s74 + $0x60] sm:$0xff]
    %v119 = vld [vmem:[%s74 + $0x68] sm:$0xff]
    %v120 = vld [vmem:[%s74 + $0x70] sm:$0xff]
    %v121 = vld [vmem:[%s74 + $0x78] sm:$0xff]
    %v122 = vld [vmem:[%s74 + $0x80] sm:$0xff]
    %v123 = vld [vmem:[%s74 + $0x88] sm:$0xff]
    %v124 = vld [vmem:[%s74 + $0x90] sm:$0xff]
    %v125 = vld [vmem:[%s74 + $0x98] sm:$0xff]
    %v126 = vld [vmem:[%s74 + $0xa0] sm:$0xff]
    %v127 = vld [vmem:[%s74 + $0xa8] sm:$0xff]
    %v128 = vld [vmem:[%s74 + $0xb0] sm:$0xff]
    %v129 = vld [vmem:[%s74 + $0xb8] sm:$0xff]
    %v130 = vld [vmem:[%s74 + $0xc0] sm:$0xff]
    %v131 = vld [vmem:[%s74 + $0xc8] sm:$0xff]
    %v132 = vld [vmem:[%s74 + $0xd0] sm:$0xff]
    %v133 = vld [vmem:[%s74 + $0xd8] sm:$0xff]
    %v134 = vld [vmem:[%s74 + $0xe0] sm:$0xff]
    %v135 = vld [vmem:[%s74 + $0xe8] sm:$0xff]
    %v136 = vld [vmem:[%s74 + $0xf0] sm:$0xff]
    %v137 = vld [vmem:[%s74 + $0xf8] sm:$0xff]
    %v138 = vld [vmem:[%s74 + $0x100] sm:$0xff]
    %v139 = vld [vmem:[%s74 + $0x108] sm:$0xff]
    %v140 = vld [vmem:[%s74 + $0x110] sm:$0xff]
    %v141 = vld [vmem:[%s74 + $0x118] sm:$0xff]
    %v142 = vld [vmem:[%s74 + $0x120] sm:$0xff]
    %v143 = vld [vmem:[%s74 + $0x128] sm:$0xff]
    %v144 = vld [vmem:[%s74 + $0x130] sm:$0xff]
    %v145 = vld [vmem:[%s74 + $0x138] sm:$0xff]
    %v146 = vld [vmem:[%s74 + $0x140] sm:$0xff]
    %v147 = vld [vmem:[%s74 + $0x148] sm:$0xff]
    %v148 = vld [vmem:[%s74 + $0x150] sm:$0xff]
    %v149 = vld [vmem:[%s74 + $0x158] sm:$0xff]
    %v150 = vld [vmem:[%s74 + $0x160] sm:$0xff]
    %v151 = vld [vmem:[%s74 + $0x168] sm:$0xff]
    %v152 = vld [vmem:[%s74 + $0x170] sm:$0xff]
    %v153 = vld [vmem:[%s74 + $0x178] sm:$0xff]
    %154 = vxpose.xlu0.b32.start [1/16] %v106, 128
    %155 = vxpose.xlu0.b32.cont [2/16] %v107, 128
    %156 = vxpose.xlu0.b32.cont [3/16] %v108, 128
    %157 = vxpose.xlu0.b32.cont [4/16] %v109, 128
    %158 = vxpose.xlu0.b32.cont [5/16] %v110, 128
    %159 = vxpose.xlu0.b32.cont [6/16] %v111, 128
    %160 = vxpose.xlu0.b32.cont [7/16] %v112, 128
    %161 = vxpose.xlu0.b32.cont [8/16] %v113, 128
    %162 = vxpose.xlu0.b32.cont [9/16] %v114, 128
    %163 = vxpose.xlu0.b32.cont [10/16] %v115, 128
    %164 = vxpose.xlu0.b32.cont [11/16] %v116, 128
    %165 = vxpose.xlu0.b32.cont [12/16] %v117, 128
    %166 = vxpose.xlu0.b32.cont [13/16] %v118, 128
    %167 = vxpose.xlu0.b32.cont [14/16] %v119, 128
    %168 = vxpose.xlu0.b32.cont [15/16] %v120, 128
    %169 = vxpose.xlu0.b32.end [16/16] %v121, 128
    %v170 = vpop.trf.xlu0
    %v171 = vpop.trf.xlu0
    %v172 = vpop.trf.xlu0
    %v173 = vpop.trf.xlu0
    %v174 = vpop.trf.xlu0
    %v175 = vpop.trf.xlu0
    %v176 = vpop.trf.xlu0
    %v177 = vpop.trf.xlu0
    %v178 = vpop.trf.xlu0
    %v179 = vpop.trf.xlu0
    %v180 = vpop.trf.xlu0
    %v181 = vpop.trf.xlu0
    %v182 = vpop.trf.xlu0
    %v183 = vpop.trf.xlu0
    %v184 = vpop.trf.xlu0
    %v185 = vpop.trf.xlu0
    %186 = vxpose.xlu0.b32.start [1/16] %v122, 128
    %187 = vxpose.xlu0.b32.cont [2/16] %v123, 128
    %188 = vxpose.xlu0.b32.cont [3/16] %v124, 128
    %189 = vxpose.xlu0.b32.cont [4/16] %v125, 128
    %190 = vxpose.xlu0.b32.cont [5/16] %v126, 128
    %191 = vxpose.xlu0.b32.cont [6/16] %v127, 128
    %192 = vxpose.xlu0.b32.cont [7/16] %v128, 128
    %193 = vxpose.xlu0.b32.cont [8/16] %v129, 128
    %194 = vxpose.xlu0.b32.cont [9/16] %v130, 128
    %195 = vxpose.xlu0.b32.cont [10/16] %v131, 128
    %196 = vxpose.xlu0.b32.cont [11/16] %v132, 128
    %197 = vxpose.xlu0.b32.cont [12/16] %v133, 128
    %198 = vxpose.xlu0.b32.cont [13/16] %v134, 128
    %199 = vxpose.xlu0.b32.cont [14/16] %v135, 128
    %200 = vxpose.xlu0.b32.cont [15/16] %v136, 128
    %201 = vxpose.xlu0.b32.end [16/16] %v137, 128
    %v202 = vpop.trf.xlu0
    %v203 = vpop.trf.xlu0
    %v204 = vpop.trf.xlu0
    %v205 = vpop.trf.xlu0
    %v206 = vpop.trf.xlu0
    %v207 = vpop.trf.xlu0
    %v208 = vpop.trf.xlu0
    %v209 = vpop.trf.xlu0
    %v210 = vpop.trf.xlu0
    %v211 = vpop.trf.xlu0
    %v212 = vpop.trf.xlu0
    %v213 = vpop.trf.xlu0
    %v214 = vpop.trf.xlu0
    %v215 = vpop.trf.xlu0
    %v216 = vpop.trf.xlu0
    %v217 = vpop.trf.xlu0
    %218 = vxpose.xlu0.b32.start [1/16] %v138, 128
    %219 = vxpose.xlu0.b32.cont [2/16] %v139, 128
    %220 = vxpose.xlu0.b32.cont [3/16] %v140, 128
    %221 = vxpose.xlu0.b32.cont [4/16] %v141, 128
    %222 = vxpose.xlu0.b32.cont [5/16] %v142, 128
    %223 = vxpose.xlu0.b32.cont [6/16] %v143, 128
    %224 = vxpose.xlu0.b32.cont [7/16] %v144, 128
    %225 = vxpose.xlu0.b32.cont [8/16] %v145, 128
    %226 = vxpose.xlu0.b32.cont [9/16] %v146, 128
    %227 = vxpose.xlu0.b32.cont [10/16] %v147, 128
    %228 = vxpose.xlu0.b32.cont [11/16] %v148, 128
    %229 = vxpose.xlu0.b32.cont [12/16] %v149, 128
    %230 = vxpose.xlu0.b32.cont [13/16] %v150, 128
    %231 = vxpose.xlu0.b32.cont [14/16] %v151, 128
    %232 = vxpose.xlu0.b32.cont [15/16] %v152, 128
    %233 = vxpose.xlu0.b32.end [16/16] %v153, 128
    %v234 = vpop.trf.xlu0
    %v235 = vpop.trf.xlu0
    %v236 = vpop.trf.xlu0
    %v237 = vpop.trf.xlu0
    %v238 = vpop.trf.xlu0
    %v239 = vpop.trf.xlu0
    %v240 = vpop.trf.xlu0
    %v241 = vpop.trf.xlu0
    %v242 = vpop.trf.xlu0
    %v243 = vpop.trf.xlu0
    %v244 = vpop.trf.xlu0
    %v245 = vpop.trf.xlu0
    %v246 = vpop.trf.xlu0
    %v247 = vpop.trf.xlu0
    %v248 = vpop.trf.xlu0
    %v249 = vpop.trf.xlu0
    %v250 = vld [vmem:[%s85] sm:$0x7]
    %v251 = vld [vmem:[%s92] sm:$0x7]
    %vm252 = vcmp.ne.s32.totalorder %v251, 15
    %v253 = vsel %vm252, 1, 0
    %v254 = vcvt.s32.f32 %v253
    %v255 = vsub.f32 1.0, %v250
    %v256 = vsel %vm252, %v250, %v255
    %v257 = vlog2.pop %v256
    %v258 = vmul.f32 %v257, 0.6931472
    %v259 = vmax.f32 %v258, -100.0
    %v260 = vsub.f32 0.0, %v259
    %v262 = vperm.slane %v250, 0
    %v263 = vperm.slane %v250, 1
    %v264 = vperm.slane %v250, 2
    %v268 = vmul.f32 %v170, %v262
    %v269 = vmul.f32 %v202, %v263
    %v270 = vmul.f32 %v234, %v264
    %v271 = vmul.f32 %v171, %v262
    %v272 = vmul.f32 %v203, %v263
    %v273 = vmul.f32 %v235, %v264
    %v274 = vperm.slane %v253, 0
    %v275 = vperm.slane %v253, 1
    %v276 = vperm.slane %v253, 2
    %vm277 = vcmp.eq.s32.totalorder %v274, 1
    %vm278 = vcmp.eq.s32.totalorder %v275, 1
    %vm279 = vcmp.eq.s32.totalorder %v276, 1
    %v280 = vsel %vm277, %v268, 0.0
    %v281 = vsel %vm278, %v269, 0.0
    %v282 = vsel %vm279, %v270, 0.0
    %v283 = vsel %vm277, %v271, 0.0
    %v284 = vsel %vm278, %v272, 0.0
    %v285 = vsel %vm279, %v273, 0.0
    %v286 = vand.u32 2147483647, %v280
    %v287 = vand.u32 2147483647, %v281
    %v288 = vand.u32 2147483647, %v282
    %v289 = vand.u32 2147483647, %v283
    %v290 = vand.u32 2147483647, %v284
    %v291 = vand.u32 2147483647, %v285
    %v292 = vsub.f32 0.0, %v286
    %v293 = vsub.f32 0.0, %v287
    %v294 = vsub.f32 0.0, %v288
    %v295 = vsub.f32 0.0, %v289
    %v296 = vsub.f32 0.0, %v290
    %v297 = vsub.f32 0.0, %v291
    %v298 = vmul.f32 %v292, 1.442695
    %v299 = vpow.pop %v298
    %v300 = vmul.f32 %v293, 1.442695
    %v301 = vpow.pop %v300
    %v302 = vmul.f32 %v294, 1.442695
    %v303 = vpow.pop %v302
    %v304 = vmul.f32 %v295, 1.442695
    %v305 = vpow.pop %v304
    %v306 = vmul.f32 %v296, 1.442695
    %v307 = vpow.pop %v306
    %v308 = vmul.f32 %v297, 1.442695
    %v309 = vpow.pop %v308
    %v310 = vadd.f32 %v299, 1.0
    %v311 = vadd.f32 %v301, 1.0
    %v312 = vadd.f32 %v303, 1.0
    %v313 = vadd.f32 %v305, 1.0
    %v314 = vadd.f32 %v307, 1.0
    %v315 = vadd.f32 %v309, 1.0
    %v316 = vlog2.pop %v310
    %v317 = vmul.f32 %v316, 0.6931472
    %v318 = vlog2.pop %v311
    %v319 = vmul.f32 %v318, 0.6931472
    %v320 = vlog2.pop %v312
    %v321 = vmul.f32 %v320, 0.6931472
    %v322 = vlog2.pop %v313
    %v323 = vmul.f32 %v322, 0.6931472
    %v324 = vlog2.pop %v314
    %v325 = vmul.f32 %v324, 0.6931472
    %v326 = vlog2.pop %v315
    %v327 = vmul.f32 %v326, 0.6931472
    %v328 = vmin.f32 %v280, 0.0
    %v329 = vmin.f32 %v281, 0.0
    %v330 = vmin.f32 %v282, 0.0
    %v331 = vmin.f32 %v283, 0.0
    %v332 = vmin.f32 %v284, 0.0
    %v333 = vmin.f32 %v285, 0.0
    %v334 = vsub.f32 %v328, %v317
    %v335 = vsub.f32 %v329, %v319
    %v336 = vsub.f32 %v330, %v321
    %v337 = vsub.f32 %v331, %v323
    %v338 = vsub.f32 %v332, %v325
    %v339 = vsub.f32 %v333, %v327
    %v340 = vmul.f32 %v334, 1.442695
    %v341 = vpow.pop %v340
    %v342 = vmul.f32 %v335, 1.442695
    %v343 = vpow.pop %v342
    %v344 = vmul.f32 %v336, 1.442695
    %v345 = vpow.pop %v344
    %v346 = vmul.f32 %v337, 1.442695
    %v347 = vpow.pop %v346
    %v348 = vmul.f32 %v338, 1.442695
    %v349 = vpow.pop %v348
    %v350 = vmul.f32 %v339, 1.442695
    %v351 = vpow.pop %v350
    %v352 = vlaneseq
    %v353 = vshrl.u32 %v352, 7
    %v354 = vadd.s32 %v353, 8
    %v355 = vperm.slane %v251, 0
    %v356 = vperm.slane %v251, 1
    %v357 = vperm.slane %v251, 2
    %vm358 = vcmp.eq.s32.totalorder %v353, %v355
    %vm359 = vcmp.eq.s32.totalorder %v353, %v356
    %vm360 = vcmp.eq.s32.totalorder %v353, %v357
    %vm361 = vcmp.eq.s32.totalorder %v354, %v355
    %vm362 = vcmp.eq.s32.totalorder %v354, %v356
    %vm363 = vcmp.eq.s32.totalorder %v354, %v357
    %v364 = vsub.f32 1.0, %v341
    %v365 = vsub.f32 1.0, %v343
    %v366 = vsub.f32 1.0, %v345
    %v367 = vsub.f32 1.0, %v347
    %v368 = vsub.f32 1.0, %v349
    %v369 = vsub.f32 1.0, %v351
    %v370 = vsel %vm358, %v364, %v341
    %v371 = vsel %vm359, %v365, %v343
    %v372 = vsel %vm360, %v366, %v345
    %v373 = vsel %vm361, %v367, %v347
    %v374 = vsel %vm362, %v368, %v349
    %v375 = vsel %vm363, %v369, %v351
    %v376 = vsel %vm358, 0.0, %v280
    %v377 = vsel %vm359, 0.0, %v281
    %v378 = vsel %vm360, 0.0, %v282
    %v379 = vsel %vm361, 0.0, %v283
    %v380 = vsel %vm362, 0.0, %v284
    %v381 = vsel %vm363, 0.0, %v285
    %v382 = vsub.f32 %v376, %v334
    %v383 = vsub.f32 %v377, %v335
    %v384 = vsub.f32 %v378, %v336
    %v385 = vsub.f32 %v379, %v337
    %v386 = vsub.f32 %v380, %v338
    %v387 = vsub.f32 %v381, %v339
    %v388 = vsel %vm358, 0.25, 0.75
    %v389 = vsel %vm359, 0.25, 0.75
    %v390 = vsel %vm360, 0.25, 0.75
    %v391 = vsel %vm361, 0.25, 0.75
    %v392 = vsel %vm362, 0.25, 0.75
    %v393 = vsel %vm363, 0.25, 0.75
    %v395 = vperm.slane %v254, 0
    %v396 = vperm.slane %v254, 1
    %v397 = vperm.slane %v254, 2
    %v401 = vmul.f32 %v388, %v395
    %v402 = vmul.f32 %v389, %v396
    %v403 = vmul.f32 %v390, %v397
    %v404 = vmul.f32 %v391, %v395
    %v405 = vmul.f32 %v392, %v396
    %v406 = vmul.f32 %v393, %v397
    %v407 = vmul.f32 %v370, %v370
    %v408 = vmul.f32 %v371, %v371
    %v409 = vmul.f32 %v372, %v372
    %v410 = vmul.f32 %v373, %v373
    %v411 = vmul.f32 %v374, %v374
    %v412 = vmul.f32 %v375, %v375
    %v413 = vmul.f32 %v401, %v407
    %v414 = vmul.f32 %v402, %v408
    %v415 = vmul.f32 %v403, %v409
    %v416 = vmul.f32 %v404, %v410
    %v417 = vmul.f32 %v405, %v411
    %v418 = vmul.f32 %v406, %v412
    %v419 = vmul.f32 %v413, %v382
    %v420 = vmul.f32 %v414, %v383
    %v421 = vmul.f32 %v415, %v384
    %v422 = vmul.f32 %v416, %v385
    %v423 = vmul.f32 %v417, %v386
    %v424 = vmul.f32 %v418, %v387
    %v425 = vld [vmem:[#allocation2] sm:$0x7]
    %vm426 = vcmask 1046528
    %v427 = vsel %vm426, %v422, 0.0
    %v428 = vadd.f32 %v419, %v427
    %v429 = vrot.slane %v428, 4
    %v430 = vadd.f32 %v428, %v429
    %v431 = vrot.slane %v430, 2
    %v432 = vadd.f32 %v430, %v431
    %v433 = vrot.slane %v432, 1
    %v434 = vadd.f32 %v432, %v433
    %v435 = vsel %vm426, %v423, 0.0
    %v436 = vadd.f32 %v420, %v435
    %v437 = vrot.slane %v436, 4
    %v438 = vadd.f32 %v436, %v437
    %v439 = vrot.slane %v438, 2
    %v440 = vadd.f32 %v438, %v439
    %v441 = vrot.slane %v440, 1
    %v442 = vadd.f32 %v440, %v441
    %v443 = vsel %vm426, %v424, 0.0
    %v444 = vadd.f32 %v421, %v443
    %v445 = vrot.slane %v444, 4
    %v446 = vadd.f32 %v444, %v445
    %v447 = vrot.slane %v446, 2
    %v448 = vadd.f32 %v446, %v447
    %v449 = vrot.slane %v448, 1
    %v450 = vadd.f32 %v448, %v449
    %v454 = vrot.slane %v442, 7
    %v455 = vrot.slane %v450, 6
    %vm456 = vcmask 1040384
    %v457 = vsel %vm456, %v434, %v454
    %vm458 = vcmask 1041408
    %v459 = vsel %vm458, %v457, %v455
    %v461 = vadd.f32 %v425, %v459
    %v462 = vlaneseq
    %vm463 = vcmp.ge.s32.totalorder %v462, 0
    %vm464 = vcmp.lt.s32.totalorder %v462, 384
    %vm465 = vmand %vm463, %vm464
    %466 = vst.msk [vmem:[#allocation2] sm:$0x7] %vm465, %v461
    %v467 = vld [vmem:[#allocation3] sm:$0x7]
    %v468 = vadd.f32 %v467, %v260
    %469 = vst.msk [vmem:[#allocation3] sm:$0x7] %vm465, %v468
    %v470 = vld [vmem:[#allocation4] sm:$0x7]
    %v471 = vadd.f32 %v470, %v254
    %472 = vst.msk [vmem:[#allocation4] sm:$0x7] %vm465, %v471
    // Predicated region
    $region18: #{tpu_custom_call.1} parent=1 // pred_check
      %p473 = pneg %p95
    $region19: #{tpu_custom_call.1} parent=1 // pred_check_branch
      %475 = sbr.rel (%p473) target = $region21
    $region20: #{tpu_custom_call.1} parent=1 // pred_region
      %v476 = vld [vmem:[#allocation3] sm:$0x7]
      %v478 = vperm.slane %v476, 0
      %v479 = vperm.slane %v476, 1
      %v480 = vperm.slane %v476, 2
      %v484 = vsel %vm456, %v478, 0.0
      %v485 = vsel %vm456, %v479, 0.0
      %v486 = vadd.f32 %v484, %v485
      %v487 = vsel %vm456, %v480, 0.0
      %v488 = vadd.f32 %v486, %v487
      %489 = vadd.xlane.f32.xlu0 %v488
      %v490 = vpop.xlane.xlu0 %489
      %v491 = vrot.slane %v490, 4
      %v492 = vadd.f32 %v490, %v491
      %v493 = vrot.slane %v492, 2
      %v494 = vadd.f32 %v492, %v493
      %v495 = vrot.slane %v494, 1
      %v496 = vadd.f32 %v494, %v495
      %s497 = vtos %v496
      %v498 = vld [vmem:[#allocation2] sm:$0x7]
      %v500 = vperm.slane %v498, 0
      %v501 = vperm.slane %v498, 1
      %v502 = vperm.slane %v498, 2
      %v506 = vsel %vm456, %v500, 0.0
      %v507 = vsel %vm456, %v501, 0.0
      %v508 = vadd.f32 %v506, %v507
      %v509 = vsel %vm456, %v502, 0.0
      %v510 = vadd.f32 %v508, %v509
      %511 = vadd.xlane.f32.xlu0 %v510
      %v512 = vpop.xlane.xlu0 %511
      %v513 = vrot.slane %v512, 4
      %v514 = vadd.f32 %v512, %v513
      %v515 = vrot.slane %v514, 2
      %v516 = vadd.f32 %v514, %v515
      %v517 = vrot.slane %v516, 1
      %v518 = vadd.f32 %v516, %v517
      %s519 = vtos %v518
      %v520 = vld [vmem:[#allocation4] sm:$0x7]
      %v522 = vperm.slane %v520, 0
      %v523 = vperm.slane %v520, 1
      %v524 = vperm.slane %v520, 2
      %v528 = vsel %vm456, %v522, 0.0
      %v529 = vsel %vm456, %v523, 0.0
      %v530 = vadd.f32 %v528, %v529
      %v531 = vsel %vm456, %v524, 0.0
      %v532 = vadd.f32 %v530, %v531
      %533 = vadd.xlane.f32.xlu0 %v532
      %v534 = vpop.xlane.xlu0 %533
      %v535 = vrot.slane %v534, 4
      %v536 = vadd.f32 %v534, %v535
      %v537 = vrot.slane %v536, 2
      %v538 = vadd.f32 %v536, %v537
      %v539 = vrot.slane %v538, 1
      %v540 = vadd.f32 %v538, %v539
      %s541 = vtos %v540
      %vm542 = vcmp.eq.s32.totalorder %v353, 0
      %v543 = vstv %s497
      %v544 = vsel %vm542, %v543, 0.0
      %vm545 = vcmp.eq.s32.totalorder %v353, 1
      %v546 = vstv %s519
      %v547 = vsel %vm545, %v546, 0.0
      %v548 = vadd.f32 %v544, %v547
      %vm549 = vcmp.eq.s32.totalorder %v353, 2
      %v550 = vstv %s541
      %v551 = vsel %vm549, %v550, 0.0
      %v552 = vadd.f32 %v548, %v551
      %553 = vst [vmem:[#allocation5] sm:$0xff] %v552
    $region21: #{tpu_custom_call.1} parent=1 // pred_fallthru
      _
    // Predicated region
    $region22: #{tpu_custom_call.1} parent=1 // pred_check
      _
    $region23: #{tpu_custom_call.1} parent=1 // pred_check_branch
      %555 = sbr.rel (0) target = $region25
    $region24: #{tpu_custom_call.1} parent=1 // pred_region
      %557 = vsyncadd [#allocation6], 0
      %s559 = sshll.u32 [#allocation5], 4
      %s560 = int_to_ptr.vmem [resolvable:$true] %s559
      %s561 = sshll.u32 %s3, 4
      %s562 = int_to_ptr.hbm [resolvable:$true] %s561
      %564 = dma.vmem_to_hbm [thread:$0]  %s560, 128, %s562, [#allocation6]
    $region25: #{tpu_custom_call.1} parent=1 // pred_fallthru
      _
    // Predicated region
    $region26: #{tpu_custom_call.1} parent=1 // pred_check
      _
    $region27: #{tpu_custom_call.1} parent=1 // pred_check_branch
      %566 = sbr.rel (0) target = $region29
    $region28: #{tpu_custom_call.1} parent=1 // pred_region
      %568 = dma.done [#allocation6], 128
    $region29: #{tpu_custom_call.1} parent=1 // pred_fallthru
      _
    %569 = vsyncpa [#allocation6], 1

// kernel: tpu_custom_call.1
$region0: #{tpu_custom_call.1}
  #allocation0 [shape = 'u32[]', space=smem, size = 0x4, offset = 0x4, fixed_abs, tag = 'smem constant byte address 0x4 - core index']
  #allocation1 [shape = 'u32[72,128]{1,0:T(1,128)}', space=vmem, size = 0x9000, scoped, tag = 'internal scratch']
  #allocation2 [shape = 'f32[1,384]{1,0:T(1,128)}', space=vmem, size = 0x600, scoped, tag = 'scratch operand']
  #allocation3 [shape = 'f32[1,384]{1,0:T(1,128)}', space=vmem, size = 0x600, scoped, tag = 'scratch operand']
  #allocation4 [shape = 'f32[1,384]{1,0:T(1,128)}', space=vmem, size = 0x600, scoped, tag = 'scratch operand']
  %s0 = inlined_call_operand.hbm [shape: f32[15,384], index: 0, kind: input, shape index: {}]
  %s1 = inlined_call_operand.hbm [shape: f32[1,384], index: 1, kind: input, shape index: {}]
  %s2 = inlined_call_operand.hbm [shape: s32[1,384], index: 2, kind: input, shape index: {}]
  %s3 = inlined_call_operand.hbm [shape: f32[1,8,128], index: 3, kind: output, shape index: {}]
  %s4 = sld [smem:[#allocation0]]
  $region42: #{tpu_custom_call.1} parent=0
    _
  %s6 = ssub.s32 1, %s4
  %s7 = scalar_select 0, %s6, %s4
  $region1: #{tpu_custom_call.1} parent=0
    #allocation5 [shape = 'u8[24576]{0}', space=vmem, size = 0x6000, scoped, tag = 'input window, operand 0, single buffered']
    #allocation6 [shape = 's32[1]{0}', space=sflag, size = 0x4, scoped, tag = 'scoped memory for tpu_custom_call.1']
    #allocation7 [shape = 's32[1]{0}', space=sflag, size = 0x4, scoped, tag = 'scoped memory for tpu_custom_call.1']
    #allocation8 [shape = 'u8[1536]{0}', space=vmem, size = 0x800, scoped, tag = 'input window, operand 1, single buffered']
    #allocation9 [shape = 's32[1]{0}', space=sflag, size = 0x4, scoped, tag = 'scoped memory for tpu_custom_call.1']
    #allocation10 [shape = 'u8[1536]{0}', space=vmem, size = 0x800, scoped, tag = 'input window, operand 2, single buffered']
    #allocation11 [shape = 'u8[4096]{0}', space=vmem, size = 0x1000, scoped, tag = 'output window, operand 0, single buffered']
    %8 = vsyncpa [#allocation6], 0
    %9 = vsyncpa [#allocation9], 0
    %10 = vsyncpa [#allocation7], 0
    // Predicated region
    $region2: #{tpu_custom_call.1} parent=1 // pred_check
      _
    $region3: #{tpu_custom_call.1} parent=1 // pred_check_branch
      %12 = sbr.rel (0) target = $region5
    $region4: #{tpu_custom_call.1} parent=1 // pred_region
      %s13 = sadd.s32 0, 0
      %s14 = smul.u32 3, %s13
      %16 = vsyncadd [#allocation6], 0
      %s17 = smul.addr %s14, 8
      %s18 = scalar_lea.hbm %s0, %s17
      %s19 = sshll.u32 %s18, 4
      %s20 = int_to_ptr.hbm [resolvable:$true] %s19
      %s21 = sshll.u32 [#allocation5], 4
      %s22 = int_to_ptr.vmem [resolvable:$true] %s21
      %27 = dma.hbm_to_vmem [thread:$0]  %s20, 768, %s22, [#allocation6], 384, 384, 24
    $region5: #{tpu_custom_call.1} parent=1 // pred_fallthru
      _
    // Predicated region
    $region6: #{tpu_custom_call.1} parent=1 // pred_check
      _
    $region7: #{tpu_custom_call.1} parent=1 // pred_check_branch
      %29 = sbr.rel (0) target = $region9
    $region8: #{tpu_custom_call.1} parent=1 // pred_region
      %s30 = sadd.s32 0, 0
      %s31 = smul.u32 3, %s30
      %33 = vsyncadd [#allocation9], 0
      %s34 = scalar_lea.hbm %s1, %s31
      %s36 = sshll.u32 %s34, 4
      %s37 = int_to_ptr.hbm [resolvable:$true] %s36
      %s38 = sshll.u32 [#allocation8], 4
      %s39 = int_to_ptr.vmem [resolvable:$true] %s38
      %41 = dma.hbm_to_vmem [thread:$0]  %s37, 48, %s39, [#allocation9]
    $region9: #{tpu_custom_call.1} parent=1 // pred_fallthru
      _
    // Predicated region
    $region10: #{tpu_custom_call.1} parent=1 // pred_check
      _
    $region11: #{tpu_custom_call.1} parent=1 // pred_check_branch
      %43 = sbr.rel (0) target = $region13
    $region12: #{tpu_custom_call.1} parent=1 // pred_region
      %s44 = sadd.s32 0, 0
      %s45 = smul.u32 3, %s44
      %47 = vsyncadd [#allocation9], 0
      %s48 = scalar_lea.hbm %s2, %s45
      %s50 = sshll.u32 %s48, 4
      %s51 = int_to_ptr.hbm [resolvable:$true] %s50
      %s52 = sshll.u32 [#allocation10], 4
      %s53 = int_to_ptr.vmem [resolvable:$true] %s52
      %55 = dma.hbm_to_vmem [thread:$0]  %s51, 48, %s53, [#allocation9]
    $region13: #{tpu_custom_call.1} parent=1 // pred_fallthru
      _
    // Predicated region
    $region14: #{tpu_custom_call.1} parent=1 // pred_check
      _
    $region15: #{tpu_custom_call.1} parent=1 // pred_check_branch
      %57 = sbr.rel (0) target = $region17
    $region16: #{tpu_custom_call.1} parent=1 // pred_region
      %59 = dma.done [#allocation6], 768
    $region17: #{tpu_custom_call.1} parent=1 // pred_fallthru
      _
    // Predicated region
    $region18: #{tpu_custom_call.1} parent=1 // pred_check
      _
    $region19: #{tpu_custom_call.1} parent=1 // pred_check_branch
      %61 = sbr.rel (0) target = $region21
    $region20: #{tpu_custom_call.1} parent=1 // pred_region
      %63 = dma.done [#allocation9], 48
    $region21: #{tpu_custom_call.1} parent=1 // pred_fallthru
      _
    // Predicated region
    $region22: #{tpu_custom_call.1} parent=1 // pred_check
      _
    $region23: #{tpu_custom_call.1} parent=1 // pred_check_branch
      %65 = sbr.rel (0) target = $region25
    $region24: #{tpu_custom_call.1} parent=1 // pred_region
      %67 = dma.done [#allocation9], 48
    $region25: #{tpu_custom_call.1} parent=1 // pred_fallthru
      _
    %s68 = sadd.s32 0, 0
    %s69 = smul.u32 3, %s68
    %s70 = sadd.s32 0, 0
    %s71 = smul.u32 3, %s70
    %s72 = sadd.s32 0, 0
    %s73 = smul.u32 3, %s72
    %p74 = scmp.eq.s32.totalorder 0, 0
    // Predicated region
    $region26: #{tpu_custom_call.1} parent=1 // pred_check
      %p75 = pneg %p74
    $region27: #{tpu_custom_call.1} parent=1 // pred_check_branch
      %77 = sbr.rel (%p75) target = $region29
    $region28: #{tpu_custom_call.1} parent=1 // pred_region
      %v78 = vlaneseq
      %vm79 = vcmp.ge.s32.totalorder %v78, 0
      %vm80 = vcmp.lt.s32.totalorder %v78, 384
      %vm81 = vmand %vm79, %vm80
      %82 = vst.msk [vmem:[#allocation2] sm:$0x7] %vm81, 0.0
      %83 = vst.msk [vmem:[#allocation3] sm:$0x7] %vm81, 0.0
      %84 = vst.msk [vmem:[#allocation4] sm:$0x7] %vm81, 0.0
    $region29: #{tpu_custom_call.1} parent=1 // pred_fallthru
      _
    %v85 = vld [vmem:[#allocation5] sm:$0xff]
    %v86 = vld [vmem:[#allocation5 + $0x8] sm:$0xff]
    %v87 = vld [vmem:[#allocation5 + $0x10] sm:$0xff]
    %v88 = vld [vmem:[#allocation5 + $0x18] sm:$0x7f]
    %v89 = vld [vmem:[#allocation5 + $0x20] sm:$0x7f]
    %v90 = vld [vmem:[#allocation5 + $0x28] sm:$0x7f]
    %v91 = vld [vmem:[#allocation8] sm:$0x7]
    %v92 = vld [vmem:[#allocation10] sm:$0x7]
    %vm93 = vcmp.ne.s32.totalorder %v92, 15
    %v94 = vsel %vm93, 1, 0
    %v95 = vcvt.s32.f32 %v94
    %v96 = vsub.f32 1.0, %v91
    %v97 = vsel %vm93, %v91, %v96
    %v98 = vlog2.pop %v97
    %v99 = vmul.f32 %v98, 0.6931472
    %v100 = vmax.f32 %v99, -100.0
    %v101 = vsub.f32 0.0, %v100
    %v103 = vperm.slane %v91, 0
    %v104 = vperm.slane %v91, 1
    %v105 = vperm.slane %v91, 2
    %v109 = vmul.f32 %v85, %v103
    %v110 = vmul.f32 %v86, %v104
    %v111 = vmul.f32 %v87, %v105
    %v112 = vmul.f32 %v88, %v103
    %v113 = vmul.f32 %v89, %v104
    %v114 = vmul.f32 %v90, %v105
    %v115 = vperm.slane %v94, 0
    %v116 = vperm.slane %v94, 1
    %v117 = vperm.slane %v94, 2
    %vm118 = vcmp.eq.s32.totalorder %v115, 1
    %vm119 = vcmp.eq.s32.totalorder %v116, 1
    %vm120 = vcmp.eq.s32.totalorder %v117, 1
    %v121 = vsel %vm118, %v109, 0.0
    %v122 = vsel %vm119, %v110, 0.0
    %v123 = vsel %vm120, %v111, 0.0
    %v124 = vsel %vm118, %v112, 0.0
    %v125 = vsel %vm119, %v113, 0.0
    %v126 = vsel %vm120, %v114, 0.0
    %v127 = vand.u32 2147483647, %v121
    %v128 = vand.u32 2147483647, %v122
    %v129 = vand.u32 2147483647, %v123
    %v130 = vand.u32 2147483647, %v124
    %v131 = vand.u32 2147483647, %v125
    %v132 = vand.u32 2147483647, %v126
    %v133 = vsub.f32 0.0, %v127
    %v134 = vsub.f32 0.0, %v128
    %v135 = vsub.f32 0.0, %v129
    %v136 = vsub.f32 0.0, %v130
    %v137 = vsub.f32 0.0, %v131
    %v138 = vsub.f32 0.0, %v132
    %v139 = vmul.f32 %v133, 1.442695
    %v140 = vpow.pop %v139
    %v141 = vmul.f32 %v134, 1.442695
    %v142 = vpow.pop %v141
    %v143 = vmul.f32 %v135, 1.442695
    %v144 = vpow.pop %v143
    %v145 = vmul.f32 %v136, 1.442695
    %v146 = vpow.pop %v145
    %v147 = vmul.f32 %v137, 1.442695
    %v148 = vpow.pop %v147
    %v149 = vmul.f32 %v138, 1.442695
    %v150 = vpow.pop %v149
    %v151 = vadd.f32 %v140, 1.0
    %v152 = vadd.f32 %v142, 1.0
    %v153 = vadd.f32 %v144, 1.0
    %v154 = vadd.f32 %v146, 1.0
    %v155 = vadd.f32 %v148, 1.0
    %v156 = vadd.f32 %v150, 1.0
    %v157 = vlog2.pop %v151
    %v158 = vmul.f32 %v157, 0.6931472
    %v159 = vlog2.pop %v152
    %v160 = vmul.f32 %v159, 0.6931472
    %v161 = vlog2.pop %v153
    %v162 = vmul.f32 %v161, 0.6931472
    %v163 = vlog2.pop %v154
    %v164 = vmul.f32 %v163, 0.6931472
    %v165 = vlog2.pop %v155
    %v166 = vmul.f32 %v165, 0.6931472
    %v167 = vlog2.pop %v156
    %v168 = vmul.f32 %v167, 0.6931472
    %v169 = vmin.f32 %v121, 0.0
    %v170 = vmin.f32 %v122, 0.0
    %v171 = vmin.f32 %v123, 0.0
    %v172 = vmin.f32 %v124, 0.0
    %v173 = vmin.f32 %v125, 0.0
    %v174 = vmin.f32 %v126, 0.0
    %v175 = vsub.f32 %v169, %v158
    %v176 = vsub.f32 %v170, %v160
    %v177 = vsub.f32 %v171, %v162
    %v178 = vsub.f32 %v172, %v164
    %v179 = vsub.f32 %v173, %v166
    %v180 = vsub.f32 %v174, %v168
    %v181 = vmul.f32 %v175, 1.442695
    %v182 = vpow.pop %v181
    %v183 = vmul.f32 %v176, 1.442695
    %v184 = vpow.pop %v183
    %v185 = vmul.f32 %v177, 1.442695
    %v186 = vpow.pop %v185
    %v187 = vmul.f32 %v178, 1.442695
    %v188 = vpow.pop %v187
    %v189 = vmul.f32 %v179, 1.442695
    %v190 = vpow.pop %v189
    %v191 = vmul.f32 %v180, 1.442695
    %v192 = vpow.pop %v191
    %v193 = vlaneseq
    %v194 = vshrl.u32 %v193, 7
    %v195 = vadd.s32 %v194, 8
    %v196 = vperm.slane %v92, 0
    %v197 = vperm.slane %v92, 1
    %v198 = vperm.slane %v92, 2
    %vm199 = vcmp.eq.s32.totalorder %v194, %v196
    %vm200 = vcmp.eq.s32.totalorder %v194, %v197
    %vm201 = vcmp.eq.s32.totalorder %v194, %v198
    %vm202 = vcmp.eq.s32.totalorder %v195, %v196
    %vm203 = vcmp.eq.s32.totalorder %v195, %v197
    %vm204 = vcmp.eq.s32.totalorder %v195, %v198
    %v205 = vsub.f32 1.0, %v182
    %v206 = vsub.f32 1.0, %v184
    %v207 = vsub.f32 1.0, %v186
    %v208 = vsub.f32 1.0, %v188
    %v209 = vsub.f32 1.0, %v190
    %v210 = vsub.f32 1.0, %v192
    %v211 = vsel %vm199, %v205, %v182
    %v212 = vsel %vm200, %v206, %v184
    %v213 = vsel %vm201, %v207, %v186
    %v214 = vsel %vm202, %v208, %v188
    %v215 = vsel %vm203, %v209, %v190
    %v216 = vsel %vm204, %v210, %v192
    %v217 = vsel %vm199, 0.0, %v121
    %v218 = vsel %vm200, 0.0, %v122
    %v219 = vsel %vm201, 0.0, %v123
    %v220 = vsel %vm202, 0.0, %v124
    %v221 = vsel %vm203, 0.0, %v125
    %v222 = vsel %vm204, 0.0, %v126
    %v223 = vsub.f32 %v217, %v175
    %v224 = vsub.f32 %v218, %v176
    %v225 = vsub.f32 %v219, %v177
    %v226 = vsub.f32 %v220, %v178
    %v227 = vsub.f32 %v221, %v179
    %v228 = vsub.f32 %v222, %v180
    %v229 = vsel %vm199, 0.25, 0.75
    %v230 = vsel %vm200, 0.25, 0.75
    %v231 = vsel %vm201, 0.25, 0.75
    %v232 = vsel %vm202, 0.25, 0.75
    %v233 = vsel %vm203, 0.25, 0.75
    %v234 = vsel %vm204, 0.25, 0.75
    %v236 = vperm.slane %v95, 0
    %v237 = vperm.slane %v95, 1
    %v238 = vperm.slane %v95, 2
    %v242 = vmul.f32 %v229, %v236
    %v243 = vmul.f32 %v230, %v237
    %v244 = vmul.f32 %v231, %v238
    %v245 = vmul.f32 %v232, %v236
    %v246 = vmul.f32 %v233, %v237
    %v247 = vmul.f32 %v234, %v238
    %v248 = vmul.f32 %v211, %v211
    %v249 = vmul.f32 %v212, %v212
    %v250 = vmul.f32 %v213, %v213
    %v251 = vmul.f32 %v214, %v214
    %v252 = vmul.f32 %v215, %v215
    %v253 = vmul.f32 %v216, %v216
    %v254 = vmul.f32 %v242, %v248
    %v255 = vmul.f32 %v243, %v249
    %v256 = vmul.f32 %v244, %v250
    %v257 = vmul.f32 %v245, %v251
    %v258 = vmul.f32 %v246, %v252
    %v259 = vmul.f32 %v247, %v253
    %v260 = vmul.f32 %v254, %v223
    %v261 = vmul.f32 %v255, %v224
    %v262 = vmul.f32 %v256, %v225
    %v263 = vmul.f32 %v257, %v226
    %v264 = vmul.f32 %v258, %v227
    %v265 = vmul.f32 %v259, %v228
    %v266 = vld [vmem:[#allocation2] sm:$0x7]
    %vm267 = vcmask 1046528
    %v268 = vsel %vm267, %v263, 0.0
    %v269 = vadd.f32 %v260, %v268
    %v270 = vrot.slane %v269, 4
    %v271 = vadd.f32 %v269, %v270
    %v272 = vrot.slane %v271, 2
    %v273 = vadd.f32 %v271, %v272
    %v274 = vrot.slane %v273, 1
    %v275 = vadd.f32 %v273, %v274
    %v276 = vsel %vm267, %v264, 0.0
    %v277 = vadd.f32 %v261, %v276
    %v278 = vrot.slane %v277, 4
    %v279 = vadd.f32 %v277, %v278
    %v280 = vrot.slane %v279, 2
    %v281 = vadd.f32 %v279, %v280
    %v282 = vrot.slane %v281, 1
    %v283 = vadd.f32 %v281, %v282
    %v284 = vsel %vm267, %v265, 0.0
    %v285 = vadd.f32 %v262, %v284
    %v286 = vrot.slane %v285, 4
    %v287 = vadd.f32 %v285, %v286
    %v288 = vrot.slane %v287, 2
    %v289 = vadd.f32 %v287, %v288
    %v290 = vrot.slane %v289, 1
    %v291 = vadd.f32 %v289, %v290
    %v295 = vrot.slane %v283, 7
    %v296 = vrot.slane %v291, 6
    %vm297 = vcmask 1040384
    %v298 = vsel %vm297, %v275, %v295
    %vm299 = vcmask 1041408
    %v300 = vsel %vm299, %v298, %v296
    %v302 = vadd.f32 %v266, %v300
    %v303 = vlaneseq
    %vm304 = vcmp.ge.s32.totalorder %v303, 0
    %vm305 = vcmp.lt.s32.totalorder %v303, 384
    %vm306 = vmand %vm304, %vm305
    %307 = vst.msk [vmem:[#allocation2] sm:$0x7] %vm306, %v302
    %v308 = vld [vmem:[#allocation3] sm:$0x7]
    %v309 = vadd.f32 %v308, %v101
    %310 = vst.msk [vmem:[#allocation3] sm:$0x7] %vm306, %v309
    %v311 = vld [vmem:[#allocation4] sm:$0x7]
    %v312 = vadd.f32 %v311, %v95
    %313 = vst.msk [vmem:[#allocation4] sm:$0x7] %vm306, %v312
    // Predicated region
    $region30: #{tpu_custom_call.1} parent=1 // pred_check
      %p314 = pneg %p74
    $region31: #{tpu_custom_call.1} parent=1 // pred_check_branch
      %316 = sbr.rel (%p314) target = $region33
    $region32: #{tpu_custom_call.1} parent=1 // pred_region
      %v317 = vld [vmem:[#allocation3] sm:$0x7]
      %v319 = vperm.slane %v317, 0
      %v320 = vperm.slane %v317, 1
      %v321 = vperm.slane %v317, 2
      %v325 = vsel %vm297, %v319, 0.0
      %v326 = vsel %vm297, %v320, 0.0
      %v327 = vadd.f32 %v325, %v326
      %v328 = vsel %vm297, %v321, 0.0
      %v329 = vadd.f32 %v327, %v328
      %330 = vadd.xlane.f32.xlu0 %v329
      %v331 = vpop.xlane.xlu0 %330
      %v332 = vrot.slane %v331, 4
      %v333 = vadd.f32 %v331, %v332
      %v334 = vrot.slane %v333, 2
      %v335 = vadd.f32 %v333, %v334
      %v336 = vrot.slane %v335, 1
      %v337 = vadd.f32 %v335, %v336
      %s338 = vtos %v337
      %v339 = vld [vmem:[#allocation2] sm:$0x7]
      %v341 = vperm.slane %v339, 0
      %v342 = vperm.slane %v339, 1
      %v343 = vperm.slane %v339, 2
      %v347 = vsel %vm297, %v341, 0.0
      %v348 = vsel %vm297, %v342, 0.0
      %v349 = vadd.f32 %v347, %v348
      %v350 = vsel %vm297, %v343, 0.0
      %v351 = vadd.f32 %v349, %v350
      %352 = vadd.xlane.f32.xlu0 %v351
      %v353 = vpop.xlane.xlu0 %352
      %v354 = vrot.slane %v353, 4
      %v355 = vadd.f32 %v353, %v354
      %v356 = vrot.slane %v355, 2
      %v357 = vadd.f32 %v355, %v356
      %v358 = vrot.slane %v357, 1
      %v359 = vadd.f32 %v357, %v358
      %s360 = vtos %v359
      %v361 = vld [vmem:[#allocation4] sm:$0x7]
      %v363 = vperm.slane %v361, 0
      %v364 = vperm.slane %v361, 1
      %v365 = vperm.slane %v361, 2
      %v369 = vsel %vm297, %v363, 0.0
      %v370 = vsel %vm297, %v364, 0.0
      %v371 = vadd.f32 %v369, %v370
      %v372 = vsel %vm297, %v365, 0.0
      %v373 = vadd.f32 %v371, %v372
      %374 = vadd.xlane.f32.xlu0 %v373
      %v375 = vpop.xlane.xlu0 %374
      %v376 = vrot.slane %v375, 4
      %v377 = vadd.f32 %v375, %v376
      %v378 = vrot.slane %v377, 2
      %v379 = vadd.f32 %v377, %v378
      %v380 = vrot.slane %v379, 1
      %v381 = vadd.f32 %v379, %v380
      %s382 = vtos %v381
      %vm383 = vcmp.eq.s32.totalorder %v194, 0
      %v384 = vstv %s338
      %v385 = vsel %vm383, %v384, 0.0
      %vm386 = vcmp.eq.s32.totalorder %v194, 1
      %v387 = vstv %s360
      %v388 = vsel %vm386, %v387, 0.0
      %v389 = vadd.f32 %v385, %v388
      %vm390 = vcmp.eq.s32.totalorder %v194, 2
      %v391 = vstv %s382
      %v392 = vsel %vm390, %v391, 0.0
      %v393 = vadd.f32 %v389, %v392
      %394 = vst [vmem:[#allocation11] sm:$0xff] %v393
    $region33: #{tpu_custom_call.1} parent=1 // pred_fallthru
      _
    // Predicated region
    $region34: #{tpu_custom_call.1} parent=1 // pred_check
      _
    $region35: #{tpu_custom_call.1} parent=1 // pred_check_branch
      %396 = sbr.rel (0) target = $region37
    $region36: #{tpu_custom_call.1} parent=1 // pred_region
      %398 = vsyncadd [#allocation7], 0
      %s400 = sshll.u32 [#allocation11], 4
      %s401 = int_to_ptr.vmem [resolvable:$true] %s400
      %s402 = sshll.u32 %s3, 4
      %s403 = int_to_ptr.hbm [resolvable:$true] %s402
      %405 = dma.vmem_to_hbm [thread:$0]  %s401, 128, %s403, [#allocation7]
    $region37: #{tpu_custom_call.1} parent=1 // pred_fallthru
      _
    // Predicated region
    $region38: #{tpu_custom_call.1} parent=1 // pred_check
      _
    $region39: #{tpu_custom_call.1} parent=1 // pred_check_branch
      %407 = sbr.rel (0) target = $region41
    $region40: #{tpu_custom_call.1} parent=1 // pred_region
      %409 = dma.done [#allocation7], 128
    $region41: #{tpu_custom_call.1} parent=1 // pred_fallthru
      _
    %410 = vsyncpa [#allocation6], 1
    %411 = vsyncpa [#allocation9], 1
    %412 = vsyncpa [#allocation7], 1

</llo_original>
